<compile_context>
chip_gen: v7x
topology: tpu7x:2x2x1
jax: 0.10.0
libtpu: 0.0.40
codegen_flags: <defaults>
</compile_context>

<pallas_src>
import functools

import jax
import jax.numpy as jnp
import numpy as np
from jax.experimental import pallas as pl
from jax.experimental.pallas import tpu as pltpu


def _round_up(n, m):
    return ((n + m - 1) // m) * m


def _cdiv(a, b):
    return (a + b - 1) // b


def _choose_bm(batch, block_b, min_steps=4):
    """Batch tile: as large as requested, multiple of 8, but keep >= min_steps grid
    steps when the batch allows it (pipeline overlap + both v7x TensorCores busy)."""
    bm = min(block_b, _round_up(batch, 8))
    if _cdiv(batch, bm) < min_steps and batch > 8 * min_steps:
        bm = min(block_b, max(8, _round_up(_cdiv(batch, min_steps), 8)))
    return bm


def vae_linear_kernel(
    x_ref, eps_ref,
    w_enc_ref, b_enc_ref,
    w_heads_ref, b_heads_ref,
    w_z_ref, b_z_ref,
    w_dec_ref, b_dec_ref,
    rec_ref, mulogvar_ref,
    *, latent_size,
):
    L = latent_size

    x = x_ref[...]                       # (bm, F) bf16 straight off HBM
    if x.dtype != jnp.bfloat16:          # trace-time fallback for f32 callers
        x = x.astype(jnp.bfloat16)
    eps = eps_ref[...]                   # (bm, L) f32 reparam noise

    # encode: h = relu(x @ W_enc + b_enc)   (bf16 x bf16 -> f32 accumulate)
    h = jnp.dot(x, w_enc_ref[...], preferred_element_type=jnp.float32) + b_enc_ref[...]
    h = jnp.maximum(h, 0.0)

    # fused mu/logvar heads: single (H, Lp=128) matmul, lane-dense result.
    ml = (jnp.dot(h.astype(jnp.bfloat16), w_heads_ref[...],
                  preferred_element_type=jnp.float32) + b_heads_ref[...])
    mu = ml[:, :L]
    logvar = ml[:, L:2 * L]

    # reparameterize: z = mu + exp(0.5 * logvar) * eps   (f32 VPU/EUP math)
    z = mu + jnp.exp(0.5 * logvar) * eps

    # z_fc + relu
    feat = (jnp.dot(z.astype(jnp.bfloat16), w_z_ref[...],
                    preferred_element_type=jnp.float32) + b_z_ref[...])
    feat = jnp.maximum(feat, 0.0)

    # decoder_fc + sigmoid (f32 math), cast to bf16 only at the store.
    logits = (jnp.dot(feat.astype(jnp.bfloat16), w_dec_ref[...],
                      preferred_element_type=jnp.float32) + b_dec_ref[...])
    rec_ref[...] = jax.nn.sigmoid(logits).astype(rec_ref.dtype)

    # lane-dense (bm, 128) bf16 store of [mu | logvar | 0-pad]; wrapper slices columns.
    mulogvar_ref[...] = ml.astype(mulogvar_ref.dtype)


@functools.partial(jax.jit, static_argnames=("latent_size", "block_b"))
def vae_linear_forward(x, eps, kp, *, latent_size, block_b=512):
    B, F = x.shape
    L = latent_size
    H = kp["w_enc"].shape[1]
    Lp = kp["w_heads"].shape[1]          # 128-padded fused-head width

    bm = _choose_bm(B, block_b)
    grid = (_cdiv(B, bm),)               # ragged last block OK: rows are independent,
                                         # OOB-row stores are discarded by Pallas.

    def full(shape):
        # Grid-invariant block: whole array, same block every step (stays in VMEM).
        return pl.BlockSpec(shape, lambda i, _n=len(shape): (0,) * _n)

    in_specs = [
        pl.BlockSpec((bm, F), lambda i: (i, 0)),   # x (bf16)
        pl.BlockSpec((bm, L), lambda i: (i, 0)),   # eps (f32)
        full((F, H)), full((1, H)),                # encoder_fc (bf16 W, f32 b)
        full((H, Lp)), full((1, Lp)),              # fused mu/logvar heads
        full((L, H)), full((1, H)),                # z_fc
        full((H, F)), full((1, F)),                # decoder_fc
    ]
    out_specs = [
        pl.BlockSpec((bm, F), lambda i: (i, 0)),   # rec_x (bf16)
        pl.BlockSpec((bm, Lp), lambda i: (i, 0)),  # [mu | logvar | pad] (bf16)
    ]
    out_shape = [
        jax.ShapeDtypeStruct((B, F), jnp.bfloat16),
        jax.ShapeDtypeStruct((B, Lp), jnp.bfloat16),
    ]

    flops = 2 * B * (F * H + H * Lp + L * H + H * F)
    transcendentals = B * (L + F)                         # exp (reparam) + sigmoid
    bytes_accessed = (
        2 * B * F + 4 * B * L                             # bf16 x + f32 eps
        + 2 * B * F + 2 * B * Lp                          # bf16 outputs
        + 2 * (F * H + H * Lp + L * H + H * F)            # bf16 weights
        + 4 * (H + Lp + H + F)                            # f32 biases
    )

    rec, mulogvar = pl.pallas_call(
        functools.partial(vae_linear_kernel, latent_size=L),
        out_shape=out_shape,
        grid_spec=pltpu.PrefetchScalarGridSpec(
            num_scalar_prefetch=0,
            grid=grid,
            in_specs=in_specs,
            out_specs=out_specs,
        ),
        compiler_params=pltpu.CompilerParams(
            dimension_semantics=("parallel",),            # batch axis -> megacore
        ),
        cost_estimate=pl.CostEstimate(
            flops=flops,
            transcendentals=transcendentals,
            bytes_accessed=bytes_accessed,
        ),
    )(
        x, eps,
        kp["w_enc"], kp["b_enc"],
        kp["w_heads"], kp["b_heads"],
        kp["w_z"], kp["b_z"],
        kp["w_dec"], kp["b_dec"],
    )

    return dict(
        rec_x=rec,
        mu=mulogvar[:, :L],
        logvar=mulogvar[:, L:2 * L],
    )


def init_params(key, feature_size, hidden_size, latent_size):
    """Kaiming-normal-style init in f32 (weights stored as (in, out))."""
    def linear(key, fan_in, fan_out):
        kw, kb = jax.random.split(key)
        std = np.sqrt(2.0 / fan_in)                      # kaiming_normal_, relu gain
        w = jax.random.normal(kw, (fan_in, fan_out), jnp.float32) * std
        bound = 1.0 / np.sqrt(fan_in)
        b = jax.random.uniform(kb, (1, fan_out), jnp.float32, -bound, bound)
        return w, b

    keys = jax.random.split(key, 5)
    w_enc, b_enc = linear(keys[0], feature_size, hidden_size)
    w_mu, b_mu = linear(keys[1], hidden_size, latent_size)
    w_lv, b_lv = linear(keys[2], hidden_size, latent_size)
    w_z, b_z = linear(keys[3], latent_size, hidden_size)
    w_dec, b_dec = linear(keys[4], hidden_size, feature_size)
    return dict(w_enc=w_enc, b_enc=b_enc, w_mu=w_mu, b_mu=b_mu, w_lv=w_lv, b_lv=b_lv,
                w_z=w_z, b_z=b_z, w_dec=w_dec, b_dec=b_dec)


def prepare_kernel_params(p, latent_size):
    """Fuse mu/logvar heads into one 128-padded weight and cast weights to bf16."""
    L = latent_size
    H = p["w_enc"].shape[1]
    Lp = max(128, _round_up(2 * L, 128))

    w_heads = jnp.zeros((H, Lp), jnp.float32)
    w_heads = w_heads.at[:, :L].set(p["w_mu"]).at[:, L:2 * L].set(p["w_lv"])
    b_heads = jnp.zeros((1, Lp), jnp.float32)
    b_heads = b_heads.at[:, :L].set(p["b_mu"][0]).at[:, L:2 * L].set(p["b_lv"][0])

    bf16 = jnp.bfloat16
    return dict(
        w_enc=p["w_enc"].astype(bf16), b_enc=p["b_enc"],
        w_heads=w_heads.astype(bf16), b_heads=b_heads,
        w_z=p["w_z"].astype(bf16), b_z=p["b_z"],
        w_dec=p["w_dec"].astype(bf16), b_dec=p["b_dec"],
    )


def reference_forward(x, eps, p):
    """Pure-f32 JAX reference matching the PyTorch module."""
    h = jnp.maximum(x @ p["w_enc"] + p["b_enc"], 0.0)
    mu = h @ p["w_mu"] + p["b_mu"]
    logvar = h @ p["w_lv"] + p["b_lv"]
    z = mu + jnp.exp(0.5 * logvar) * eps
    feat = jnp.maximum(z @ p["w_z"] + p["b_z"], 0.0)
    rec = jax.nn.sigmoid(feat @ p["w_dec"] + p["b_dec"])
    return dict(rec_x=rec, mu=mu, logvar=logvar)


if __name__ == "__main__":
    # Small-but-MXU-friendly shapes: 16x16 "images" -> feature_size=256,
    # hidden_size=128 (stand-in for 500/200), latent_size=32.  Batch=512 so the
    # tile chooser gives bm=128 / grid=(4,): >= 2 steps per TensorCore on v7x.
    B, IMG_H, IMG_W = 512, 16, 16
    FEATURE = IMG_H * IMG_W
    HIDDEN = 128
    LATENT = 32

    key = jax.random.PRNGKey(0)
    k_params, k_x, k_eps = jax.random.split(key, 3)

    params_f32 = init_params(k_params, FEATURE, HIDDEN, LATENT)
    kparams = prepare_kernel_params(params_f32, LATENT)

    # Data pipeline produces bf16 pixels directly (no wrapper-side cast pass).
    x = jax.random.uniform(k_x, (B, FEATURE), jnp.float32).astype(jnp.bfloat16)
    # TODO(synk): eps kept as an explicit input so the result is checkable against the
    # f32 reference (== torch.randn_like noise); when deterministic noise isn't needed,
    # draw it in-kernel with pltpu.prng_seed + pltpu.stateful_normal and drop this stream.
    eps = jax.random.normal(k_eps, (B, LATENT), jnp.float32)

    out = vae_linear_forward(x, eps, kparams, latent_size=LATENT, block_b=512)
    jax.block_until_ready(out)

    ref = reference_forward(x.astype(jnp.float32), eps, params_f32)

    def to_f32(a):
        return np.asarray(jax.device_get(a)).astype(np.float32)

    # bf16 matmul operands + bf16 output storage vs pure-f32 reference.
    np.testing.assert_allclose(to_f32(out["mu"]), np.asarray(ref["mu"]),
                               atol=5e-2, rtol=5e-2)
    np.testing.assert_allclose(to_f32(out["logvar"]), np.asarray(ref["logvar"]),
                               atol=5e-2, rtol=5e-2)
    np.testing.assert_allclose(to_f32(out["rec_x"]), np.asarray(ref["rec_x"]),
                               atol=5e-2, rtol=5e-2)

    print("KERNEL_OK")
</pallas_src>

<mosaic_0001>
module attributes {stable_mosaic.version = 11 : i64} {
  func.func @vae_linear_kernel(%arg0: i32, %arg1: memref<128x256xbf16, #tpu.memory_space<vmem>>, %arg2: memref<128x32xf32, #tpu.memory_space<vmem>>, %arg3: memref<256x128xbf16, #tpu.memory_space<vmem>>, %arg4: memref<1x128xf32, #tpu.memory_space<vmem>>, %arg5: memref<128x128xbf16, #tpu.memory_space<vmem>>, %arg6: memref<1x128xf32, #tpu.memory_space<vmem>>, %arg7: memref<32x128xbf16, #tpu.memory_space<vmem>>, %arg8: memref<1x128xf32, #tpu.memory_space<vmem>>, %arg9: memref<128x256xbf16, #tpu.memory_space<vmem>>, %arg10: memref<1x256xf32, #tpu.memory_space<vmem>>, %arg11: memref<128x256xbf16, #tpu.memory_space<vmem>>, %arg12: memref<128x128xbf16, #tpu.memory_space<vmem>>) attributes {dimension_semantics = [#tpu.dimension_semantics<parallel>], iteration_bounds = array<i64: 4>, scalar_prefetch = 0 : i64, scratch_operands = 0 : i64, tpu.core_type = #tpu.core_type<tc>, window_params = [{transform_indices = @transform_0, window_bounds = array<i64: 128, 256>}, {transform_indices = @transform_1, window_bounds = array<i64: 128, 32>}, {pipeline_mode = #tpu.pipeline_mode<synchronous>, transform_indices = @transform_2, window_bounds = array<i64: 256, 128>}, {pipeline_mode = #tpu.pipeline_mode<synchronous>, transform_indices = @transform_3, window_bounds = array<i64: 1, 128>}, {pipeline_mode = #tpu.pipeline_mode<synchronous>, transform_indices = @transform_4, window_bounds = array<i64: 128, 128>}, {pipeline_mode = #tpu.pipeline_mode<synchronous>, transform_indices = @transform_5, window_bounds = array<i64: 1, 128>}, {pipeline_mode = #tpu.pipeline_mode<synchronous>, transform_indices = @transform_6, window_bounds = array<i64: 32, 128>}, {pipeline_mode = #tpu.pipeline_mode<synchronous>, transform_indices = @transform_7, window_bounds = array<i64: 1, 128>}, {pipeline_mode = #tpu.pipeline_mode<synchronous>, transform_indices = @transform_8, window_bounds = array<i64: 128, 256>}, {pipeline_mode = #tpu.pipeline_mode<synchronous>, transform_indices = @transform_9, window_bounds = array<i64: 1, 256>}, {transform_indices = @transform_10, window_bounds = array<i64: 128, 256>}, {transform_indices = @transform_11, window_bounds = array<i64: 128, 128>}]} {
    %c0 = arith.constant 0 : index
    %c0_0 = arith.constant 0 : index
    %0 = vector.load %arg1[%c0, %c0_0] : memref<128x256xbf16, #tpu.memory_space<vmem>>, vector<128x256xbf16>
    %c0_1 = arith.constant 0 : index
    %c0_2 = arith.constant 0 : index
    %1 = vector.load %arg2[%c0_1, %c0_2] : memref<128x32xf32, #tpu.memory_space<vmem>>, vector<128x32xf32>
    %c0_3 = arith.constant 0 : index
    %c0_4 = arith.constant 0 : index
    %2 = vector.load %arg3[%c0_3, %c0_4] : memref<256x128xbf16, #tpu.memory_space<vmem>>, vector<256x128xbf16>
    %cst = arith.constant dense<0.000000e+00> : vector<128x128xf32>
    %3 = tpu.matmul %0, %2, %cst {dimension_numbers = #tpu.dot_dimension_numbers<[1], [0], [0], [1], [0, 0, 1, 1], [], []>} : vector<128x256xbf16>, vector<256x128xbf16>, vector<128x128xf32> -> vector<128x128xf32>
    %c0_5 = arith.constant 0 : index
    %c0_6 = arith.constant 0 : index
    %4 = vector.load %arg4[%c0_5, %c0_6] : memref<1x128xf32, #tpu.memory_space<vmem>>, vector<1x128xf32>
    %5 = vector.broadcast %4 : vector<1x128xf32> to vector<128x128xf32>
    %6 = arith.addf %3, %5 : vector<128x128xf32>
    %cst_7 = arith.constant 0.000000e+00 : f32
    %7 = vector.broadcast %cst_7 : f32 to vector<128x128xf32>
    %8 = arith.maximumf %6, %7 : vector<128x128xf32>
    %9 = arith.truncf %8 : vector<128x128xf32> to vector<128x128xbf16>
    %c0_8 = arith.constant 0 : index
    %c0_9 = arith.constant 0 : index
    %10 = vector.load %arg5[%c0_8, %c0_9] : memref<128x128xbf16, #tpu.memory_space<vmem>>, vector<128x128xbf16>
    %cst_10 = arith.constant dense<0.000000e+00> : vector<128x128xf32>
    %11 = tpu.matmul %9, %10, %cst_10 {dimension_numbers = #tpu.dot_dimension_numbers<[1], [0], [0], [1], [0, 0, 1, 1], [], []>} : vector<128x128xbf16>, vector<128x128xbf16>, vector<128x128xf32> -> vector<128x128xf32>
    %c0_11 = arith.constant 0 : index
    %c0_12 = arith.constant 0 : index
    %12 = vector.load %arg6[%c0_11, %c0_12] : memref<1x128xf32, #tpu.memory_space<vmem>>, vector<1x128xf32>
    %13 = vector.broadcast %12 : vector<1x128xf32> to vector<128x128xf32>
    %14 = arith.addf %11, %13 : vector<128x128xf32>
    %15 = vector.extract_strided_slice %14 {offsets = [0, 0], sizes = [128, 32], strides = [1, 1]} : vector<128x128xf32> to vector<128x32xf32>
    %16 = vector.extract_strided_slice %14 {offsets = [0, 32], sizes = [128, 32], strides = [1, 1]} : vector<128x128xf32> to vector<128x32xf32>
    %cst_13 = arith.constant 5.000000e-01 : f32
    %17 = vector.broadcast %cst_13 : f32 to vector<128x32xf32>
    %18 = arith.mulf %17, %16 : vector<128x32xf32>
    %19 = math.exp %18 : vector<128x32xf32>
    %20 = arith.mulf %19, %1 : vector<128x32xf32>
    %21 = arith.addf %15, %20 : vector<128x32xf32>
    %22 = arith.truncf %21 : vector<128x32xf32> to vector<128x32xbf16>
    %c0_14 = arith.constant 0 : index
    %c0_15 = arith.constant 0 : index
    %23 = vector.load %arg7[%c0_14, %c0_15] : memref<32x128xbf16, #tpu.memory_space<vmem>>, vector<32x128xbf16>
    %cst_16 = arith.constant dense<0.000000e+00> : vector<128x128xf32>
    %24 = tpu.matmul %22, %23, %cst_16 {dimension_numbers = #tpu.dot_dimension_numbers<[1], [0], [0], [1], [0, 0, 1, 1], [], []>} : vector<128x32xbf16>, vector<32x128xbf16>, vector<128x128xf32> -> vector<128x128xf32>
    %c0_17 = arith.constant 0 : index
    %c0_18 = arith.constant 0 : index
    %25 = vector.load %arg8[%c0_17, %c0_18] : memref<1x128xf32, #tpu.memory_space<vmem>>, vector<1x128xf32>
    %26 = vector.broadcast %25 : vector<1x128xf32> to vector<128x128xf32>
    %27 = arith.addf %24, %26 : vector<128x128xf32>
    %cst_19 = arith.constant 0.000000e+00 : f32
    %28 = vector.broadcast %cst_19 : f32 to vector<128x128xf32>
    %29 = arith.maximumf %27, %28 : vector<128x128xf32>
    %30 = arith.truncf %29 : vector<128x128xf32> to vector<128x128xbf16>
    %c0_20 = arith.constant 0 : index
    %c0_21 = arith.constant 0 : index
    %31 = vector.load %arg9[%c0_20, %c0_21] : memref<128x256xbf16, #tpu.memory_space<vmem>>, vector<128x256xbf16>
    %cst_22 = arith.constant dense<0.000000e+00> : vector<128x256xf32>
    %32 = tpu.matmul %30, %31, %cst_22 {dimension_numbers = #tpu.dot_dimension_numbers<[1], [0], [0], [1], [0, 0, 1, 1], [], []>} : vector<128x128xbf16>, vector<128x256xbf16>, vector<128x256xf32> -> vector<128x256xf32>
    %c0_23 = arith.constant 0 : index
    %c0_24 = arith.constant 0 : index
    %33 = vector.load %arg10[%c0_23, %c0_24] : memref<1x256xf32, #tpu.memory_space<vmem>>, vector<1x256xf32>
    %34 = vector.broadcast %33 : vector<1x256xf32> to vector<128x256xf32>
    %35 = arith.addf %32, %34 : vector<128x256xf32>
    %36 = arith.negf %35 : vector<128x256xf32>
    %37 = math.exp %36 : vector<128x256xf32>
    %cst_25 = arith.constant 1.000000e+00 : f32
    %38 = vector.broadcast %cst_25 : f32 to vector<128x256xf32>
    %39 = arith.addf %38, %37 : vector<128x256xf32>
    %40 = arith.divf %38, %39 : vector<128x256xf32>
    %41 = arith.truncf %40 : vector<128x256xf32> to vector<128x256xbf16>
    %c0_26 = arith.constant 0 : index
    %c0_27 = arith.constant 0 : index
    %42 = vector.load %arg11[%c0_26, %c0_27] : memref<128x256xbf16, #tpu.memory_space<vmem>>, vector<128x256xbf16>
    tpu.vector_store %arg11[%c0_26, %c0_27], %41 {strides = array<i32>} : memref<128x256xbf16, #tpu.memory_space<vmem>>, vector<128x256xbf16>,
    %43 = arith.truncf %14 : vector<128x128xf32> to vector<128x128xbf16>
    %c0_28 = arith.constant 0 : index
    %c0_29 = arith.constant 0 : index
    %44 = vector.load %arg12[%c0_28, %c0_29] : memref<128x128xbf16, #tpu.memory_space<vmem>>, vector<128x128xbf16>
    tpu.vector_store %arg12[%c0_28, %c0_29], %43 {strides = array<i32>} : memref<128x128xbf16, #tpu.memory_space<vmem>>, vector<128x128xbf16>,
    return
  }
  func.func @transform_0(%arg0: i32) -> (i32, i32) {
    %c0_i32 = arith.constant 0 : i32
    %c0_i32_0 = arith.constant 0 : i32
    return %arg0, %c0_i32 : i32, i32
  }
  func.func @transform_1(%arg0: i32) -> (i32, i32) {
    %c0_i32 = arith.constant 0 : i32
    %c0_i32_0 = arith.constant 0 : i32
    return %arg0, %c0_i32 : i32, i32
  }
  func.func @transform_2(%arg0: i32) -> (i32, i32) {
    %c0_i32 = arith.constant 0 : i32
    %c0_i32_0 = arith.constant 0 : i32
    %c0_i32_1 = arith.constant 0 : i32
    return %c0_i32, %c0_i32_0 : i32, i32
  }
  func.func @transform_3(%arg0: i32) -> (i32, i32) {
    %c0_i32 = arith.constant 0 : i32
    %c0_i32_0 = arith.constant 0 : i32
    %c0_i32_1 = arith.constant 0 : i32
    return %c0_i32, %c0_i32_0 : i32, i32
  }
  func.func @transform_4(%arg0: i32) -> (i32, i32) {
    %c0_i32 = arith.constant 0 : i32
    %c0_i32_0 = arith.constant 0 : i32
    %c0_i32_1 = arith.constant 0 : i32
    return %c0_i32, %c0_i32_0 : i32, i32
  }
  func.func @transform_5(%arg0: i32) -> (i32, i32) {
    %c0_i32 = arith.constant 0 : i32
    %c0_i32_0 = arith.constant 0 : i32
    %c0_i32_1 = arith.constant 0 : i32
    return %c0_i32, %c0_i32_0 : i32, i32
  }
  func.func @transform_6(%arg0: i32) -> (i32, i32) {
    %c0_i32 = arith.constant 0 : i32
    %c0_i32_0 = arith.constant 0 : i32
    %c0_i32_1 = arith.constant 0 : i32
    return %c0_i32, %c0_i32_0 : i32, i32
  }
  func.func @transform_7(%arg0: i32) -> (i32, i32) {
    %c0_i32 = arith.constant 0 : i32
    %c0_i32_0 = arith.constant 0 : i32
    %c0_i32_1 = arith.constant 0 : i32
    return %c0_i32, %c0_i32_0 : i32, i32
  }
  func.func @transform_8(%arg0: i32) -> (i32, i32) {
    %c0_i32 = arith.constant 0 : i32
    %c0_i32_0 = arith.constant 0 : i32
    %c0_i32_1 = arith.constant 0 : i32
    return %c0_i32, %c0_i32_0 : i32, i32
  }
  func.func @transform_9(%arg0: i32) -> (i32, i32) {
    %c0_i32 = arith.constant 0 : i32
    %c0_i32_0 = arith.constant 0 : i32
    %c0_i32_1 = arith.constant 0 : i32
    return %c0_i32, %c0_i32_0 : i32, i32
  }
  func.func @transform_10(%arg0: i32) -> (i32, i32) {
    %c0_i32 = arith.constant 0 : i32
    %c0_i32_0 = arith.constant 0 : i32
    return %arg0, %c0_i32 : i32, i32
  }
  func.func @transform_11(%arg0: i32) -> (i32, i32) {
    %c0_i32 = arith.constant 0 : i32
    %c0_i32_0 = arith.constant 0 : i32
    return %arg0, %c0_i32 : i32, i32
  }
}

</mosaic_0001>

<llo_original>
// kernel: vae_linear_forward.1
$region0: #{vae_linear_forward.1}
  #allocation0 [shape = 'u32[]', space=smem, size = 0x4, offset = 0x4, fixed_abs, tag = 'smem constant byte address 0x4 - core index']
  #allocation1 [shape = 'u32[144,128]{1,0:T(1,128)}', space=vmem, size = 0x12000, scoped, tag = 'internal scratch']
  %s0 = inlined_call_operand.vmem [shape: bf16[512,256], index: 0, kind: input, shape index: {}]
  %s1 = inlined_call_operand.vmem [shape: f32[512,32], index: 1, kind: input, shape index: {}]
  %s2 = inlined_call_operand.vmem [shape: bf16[256,128], index: 2, kind: input, shape index: {}]
  %s3 = inlined_call_operand.vmem [shape: f32[1,128], index: 3, kind: input, shape index: {}]
  %s4 = inlined_call_operand.hbm [shape: bf16[128,128], index: 4, kind: input, shape index: {}]
  %s5 = inlined_call_operand.vmem [shape: f32[1,128], index: 5, kind: input, shape index: {}]
  %s6 = inlined_call_operand.vmem [shape: bf16[32,128], index: 6, kind: input, shape index: {}]
  %s7 = inlined_call_operand.vmem [shape: f32[1,128], index: 7, kind: input, shape index: {}]
  %s8 = inlined_call_operand.hbm [shape: bf16[128,256], index: 8, kind: input, shape index: {}]
  %s9 = inlined_call_operand.vmem [shape: f32[1,256], index: 9, kind: input, shape index: {}]
  %s10 = inlined_call_operand.hbm [shape: bf16[512,256], index: 10, kind: output, shape index: {0}]
  %s11 = inlined_call_operand.vmem [shape: bf16[512,128], index: 11, kind: output, shape index: {1}]
  %12 = xla_tuple %s10, %s11
  %s13 = sld [smem:[#allocation0]]
  $region89: #{vae_linear_forward.1} parent=0
    _
  %s15 = ssub.s32 1, %s13
  %s16 = scalar_select 0, %s15, %s13
  $region1: #{vae_linear_forward.1} parent=0
    #allocation2 [shape = 'u8[32768]{0}', space=vmem, size = 0x8000, scoped, tag = 'input window, operand 4, single buffered']
    #allocation3 [shape = 's32[2]{0}', space=sflag, size = 0x8, scoped, tag = 'scoped memory for vae_linear_forward.1']
    #allocation4 [shape = 's32[2]{0}', space=sflag, size = 0x8, scoped, tag = 'scoped memory for vae_linear_forward.1']
    #allocation5 [shape = 'u8[65536]{0}', space=vmem, size = 0x10000, scoped, tag = 'input window, operand 8, single buffered']
    #allocation6 [shape = 's32[1]{0}', space=sflag, size = 0x4, scoped, tag = 'scoped memory for vae_linear_forward.1']
    #allocation7 [shape = 'u8[131072]{0}', space=vmem, size = 0x20000, scoped, tag = 'output window, operand 0']
    %17 = vsyncpa [#allocation3], 0
    %18 = vsyncpa [#allocation6], 0
    %19 = vsyncpa [#allocation4], 0
    %s20 = scalar_lea.sflag [#allocation4], 1
    %21 = vsyncpa %s20, 0
    loop: start=0, step=1, limit=6
    $region2: #{vae_linear_forward.1} parent=1 // loop_pre_header
      _
    $region3: #{vae_linear_forward.1} parent=1 // loop_header
      %s23 = sphi 0, %s27
      %p24 = scmp.ge.s32.totalorder %s23, 6
      %s33 = sphi 0, %s35
      %s36 = sphi 0, %s33
      %s37 = sphi 0, %s36
      %s53 = sphi 0, %s37
      %s59 = sphi 0, %s61
      %s62 = sphi 0, %s59
      %s63 = sphi 0, %s62
      %s79 = sphi 0, %s63
      %s83 = sphi 0, %s83
      %s85 = sphi 0, %s83
      %s86 = sphi 0, %s85
      %s100 = sphi 0, %s86
      %s104 = sphi 0, %s104
      %s106 = sphi 0, %s104
      %s107 = sphi 0, %s106
      %s121 = sphi 0, %s107
      %s125 = sphi 0, %s125
      %s127 = sphi 0, %s125
      %s128 = sphi 0, %s127
      %s142 = sphi 0, %s128
      %s146 = sphi 0, %s146
      %s148 = sphi 0, %s146
      %s149 = sphi 0, %s148
      %s163 = sphi 0, %s149
      %s167 = sphi 0, %s167
      %s169 = sphi 0, %s167
      %s170 = sphi 0, %s169
      %s184 = sphi 0, %s170
      %s188 = sphi 0, %s188
      %s190 = sphi 0, %s188
      %s191 = sphi 0, %s190
      %s205 = sphi 0, %s191
      %s209 = sphi 0, %s209
      %s211 = sphi 0, %s209
      %s212 = sphi 0, %s211
      %s226 = sphi 0, %s212
      %s230 = sphi 0, %s230
      %s232 = sphi 0, %s230
      %s233 = sphi 0, %s232
      %s247 = sphi 0, %s233
      %s253 = sphi 0, %s255
      %s256 = sphi 0, %s253
      %s257 = sphi 0, %s256
      %s273 = sphi 0, %s257
      %s279 = sphi 0, %s281
      %s282 = sphi 0, %s279
      %s283 = sphi 0, %s282
      %s299 = sphi 0, %s283
    $region4: #{vae_linear_forward.1} parent=1 // loop_header_branch
      %26 = sbr.rel (%p24) target = $region8
    $region5: #{vae_linear_forward.1} parent=1 // loop_body
      %s28 = ssub.s32 %s23, 1
      %s29 = ssub.s32 %s23, 2
      %s30 = sadd.s32 %s23, 1
      %s31 = ssub.s32 %s23, %s30
      %p32 = scmp.eq.s32.totalorder %s31, 0
      %s34 = sadd.s32 %s33, 1
      %s35 = scalar_select %p32, %s33, %s34
      %p38 = pneg %p32
      %p39 = scmp.eq.s32.totalorder %s23, 3
      %p40 = por %p38, %p39
      %p41 = scmp.ne.s32.totalorder %s33, %s36
      %p42 = scmp.eq.s32.totalorder %s23, 0
      %p43 = por %p41, %p42
      %p44 = scmp.ne.s32.totalorder %s33, %s36
      %p45 = scmp.eq.s32.totalorder %s28, 3
      %p46 = por %p44, %p45
      %p47 = scmp.ne.s32.totalorder %s36, %s37
      %p48 = scmp.eq.s32.totalorder %s28, 0
      %p49 = por %p47, %p48
      %p50 = scmp.ne.s32.totalorder %s36, %s37
      %p51 = scmp.eq.s32.totalorder %s29, 3
      %p52 = por %p50, %p51
      %p54 = scmp.ne.s32.totalorder %s37, %s53
      %p55 = scmp.eq.s32.totalorder %s29, 0
      %p56 = por %p54, %p55
      %s57 = ssub.s32 %s23, %s30
      %p58 = scmp.eq.s32.totalorder %s57, 0
      %s60 = sadd.s32 %s59, 1
      %s61 = scalar_select %p58, %s59, %s60
      %p64 = pneg %p58
      %p65 = scmp.eq.s32.totalorder %s23, 3
      %p66 = por %p64, %p65
      %p67 = scmp.ne.s32.totalorder %s59, %s62
      %p68 = scmp.eq.s32.totalorder %s23, 0
      %p69 = por %p67, %p68
      %p70 = scmp.ne.s32.totalorder %s59, %s62
      %p71 = scmp.eq.s32.totalorder %s28, 3
      %p72 = por %p70, %p71
      %p73 = scmp.ne.s32.totalorder %s62, %s63
      %p74 = scmp.eq.s32.totalorder %s28, 0
      %p75 = por %p73, %p74
      %p76 = scmp.ne.s32.totalorder %s62, %s63
      %p77 = scmp.eq.s32.totalorder %s29, 3
      %p78 = por %p76, %p77
      %p80 = scmp.ne.s32.totalorder %s63, %s79
      %p81 = scmp.eq.s32.totalorder %s29, 0
      %p82 = por %p80, %p81
      %s84 = sadd.s32 %s83, 1
      %p87 = scmp.eq.s32.totalorder %s23, 3
      %p88 = scmp.ne.s32.totalorder %s83, %s85
      %p89 = scmp.eq.s32.totalorder %s23, 0
      %p90 = por %p88, %p89
      %p91 = scmp.ne.s32.totalorder %s83, %s85
      %p92 = scmp.eq.s32.totalorder %s28, 3
      %p93 = por %p91, %p92
      %p94 = scmp.ne.s32.totalorder %s85, %s86
      %p95 = scmp.eq.s32.totalorder %s28, 0
      %p96 = por %p94, %p95
      %p97 = scmp.ne.s32.totalorder %s85, %s86
      %p98 = scmp.eq.s32.totalorder %s29, 3
      %p99 = por %p97, %p98
      %p101 = scmp.ne.s32.totalorder %s86, %s100
      %p102 = scmp.eq.s32.totalorder %s29, 0
      %p103 = por %p101, %p102
      %s105 = sadd.s32 %s104, 1
      %p108 = scmp.eq.s32.totalorder %s23, 3
      %p109 = scmp.ne.s32.totalorder %s104, %s106
      %p110 = scmp.eq.s32.totalorder %s23, 0
      %p111 = por %p109, %p110
      %p112 = scmp.ne.s32.totalorder %s104, %s106
      %p113 = scmp.eq.s32.totalorder %s28, 3
      %p114 = por %p112, %p113
      %p115 = scmp.ne.s32.totalorder %s106, %s107
      %p116 = scmp.eq.s32.totalorder %s28, 0
      %p117 = por %p115, %p116
      %p118 = scmp.ne.s32.totalorder %s106, %s107
      %p119 = scmp.eq.s32.totalorder %s29, 3
      %p120 = por %p118, %p119
      %p122 = scmp.ne.s32.totalorder %s107, %s121
      %p123 = scmp.eq.s32.totalorder %s29, 0
      %p124 = por %p122, %p123
      %s126 = sadd.s32 %s125, 1
      %p129 = scmp.eq.s32.totalorder %s23, 3
      %p130 = scmp.ne.s32.totalorder %s125, %s127
      %p131 = scmp.eq.s32.totalorder %s23, 0
      %p132 = por %p130, %p131
      %p133 = scmp.ne.s32.totalorder %s125, %s127
      %p134 = scmp.eq.s32.totalorder %s28, 3
      %p135 = por %p133, %p134
      %p136 = scmp.ne.s32.totalorder %s127, %s128
      %p137 = scmp.eq.s32.totalorder %s28, 0
      %p138 = por %p136, %p137
      %p139 = scmp.ne.s32.totalorder %s127, %s128
      %p140 = scmp.eq.s32.totalorder %s29, 3
      %p141 = por %p139, %p140
      %p143 = scmp.ne.s32.totalorder %s128, %s142
      %p144 = scmp.eq.s32.totalorder %s29, 0
      %p145 = por %p143, %p144
      %s147 = sadd.s32 %s146, 1
      %p150 = scmp.eq.s32.totalorder %s23, 3
      %p151 = scmp.ne.s32.totalorder %s146, %s148
      %p152 = scmp.eq.s32.totalorder %s23, 0
      %p153 = por %p151, %p152
      %p154 = scmp.ne.s32.totalorder %s146, %s148
      %p155 = scmp.eq.s32.totalorder %s28, 3
      %p156 = por %p154, %p155
      %p157 = scmp.ne.s32.totalorder %s148, %s149
      %p158 = scmp.eq.s32.totalorder %s28, 0
      %p159 = por %p157, %p158
      %p160 = scmp.ne.s32.totalorder %s148, %s149
      %p161 = scmp.eq.s32.totalorder %s29, 3
      %p162 = por %p160, %p161
      %p164 = scmp.ne.s32.totalorder %s149, %s163
      %p165 = scmp.eq.s32.totalorder %s29, 0
      %p166 = por %p164, %p165
      %s168 = sadd.s32 %s167, 1
      %p171 = scmp.eq.s32.totalorder %s23, 3
      %p172 = scmp.ne.s32.totalorder %s167, %s169
      %p173 = scmp.eq.s32.totalorder %s23, 0
      %p174 = por %p172, %p173
      %p175 = scmp.ne.s32.totalorder %s167, %s169
      %p176 = scmp.eq.s32.totalorder %s28, 3
      %p177 = por %p175, %p176
      %p178 = scmp.ne.s32.totalorder %s169, %s170
      %p179 = scmp.eq.s32.totalorder %s28, 0
      %p180 = por %p178, %p179
      %p181 = scmp.ne.s32.totalorder %s169, %s170
      %p182 = scmp.eq.s32.totalorder %s29, 3
      %p183 = por %p181, %p182
      %p185 = scmp.ne.s32.totalorder %s170, %s184
      %p186 = scmp.eq.s32.totalorder %s29, 0
      %p187 = por %p185, %p186
      %s189 = sadd.s32 %s188, 1
      %p192 = scmp.eq.s32.totalorder %s23, 3
      %p193 = scmp.ne.s32.totalorder %s188, %s190
      %p194 = scmp.eq.s32.totalorder %s23, 0
      %p195 = por %p193, %p194
      %p196 = scmp.ne.s32.totalorder %s188, %s190
      %p197 = scmp.eq.s32.totalorder %s28, 3
      %p198 = por %p196, %p197
      %p199 = scmp.ne.s32.totalorder %s190, %s191
      %p200 = scmp.eq.s32.totalorder %s28, 0
      %p201 = por %p199, %p200
      %p202 = scmp.ne.s32.totalorder %s190, %s191
      %p203 = scmp.eq.s32.totalorder %s29, 3
      %p204 = por %p202, %p203
      %p206 = scmp.ne.s32.totalorder %s191, %s205
      %p207 = scmp.eq.s32.totalorder %s29, 0
      %p208 = por %p206, %p207
      %s210 = sadd.s32 %s209, 1
      %p213 = scmp.eq.s32.totalorder %s23, 3
      %p214 = scmp.ne.s32.totalorder %s209, %s211
      %p215 = scmp.eq.s32.totalorder %s23, 0
      %p216 = por %p214, %p215
      %p217 = scmp.ne.s32.totalorder %s209, %s211
      %p218 = scmp.eq.s32.totalorder %s28, 3
      %p219 = por %p217, %p218
      %p220 = scmp.ne.s32.totalorder %s211, %s212
      %p221 = scmp.eq.s32.totalorder %s28, 0
      %p222 = por %p220, %p221
      %p223 = scmp.ne.s32.totalorder %s211, %s212
      %p224 = scmp.eq.s32.totalorder %s29, 3
      %p225 = por %p223, %p224
      %p227 = scmp.ne.s32.totalorder %s212, %s226
      %p228 = scmp.eq.s32.totalorder %s29, 0
      %p229 = por %p227, %p228
      %s231 = sadd.s32 %s230, 1
      %p234 = scmp.eq.s32.totalorder %s23, 3
      %p235 = scmp.ne.s32.totalorder %s230, %s232
      %p236 = scmp.eq.s32.totalorder %s23, 0
      %p237 = por %p235, %p236
      %p238 = scmp.ne.s32.totalorder %s230, %s232
      %p239 = scmp.eq.s32.totalorder %s28, 3
      %p240 = por %p238, %p239
      %p241 = scmp.ne.s32.totalorder %s232, %s233
      %p242 = scmp.eq.s32.totalorder %s28, 0
      %p243 = por %p241, %p242
      %p244 = scmp.ne.s32.totalorder %s232, %s233
      %p245 = scmp.eq.s32.totalorder %s29, 3
      %p246 = por %p244, %p245
      %p248 = scmp.ne.s32.totalorder %s233, %s247
      %p249 = scmp.eq.s32.totalorder %s29, 0
      %p250 = por %p248, %p249
      %s251 = ssub.s32 %s23, %s30
      %p252 = scmp.eq.s32.totalorder %s251, 0
      %s254 = sadd.s32 %s253, 1
      %s255 = scalar_select %p252, %s253, %s254
      %p258 = pneg %p252
      %p259 = scmp.eq.s32.totalorder %s23, 3
      %p260 = por %p258, %p259
      %p261 = scmp.ne.s32.totalorder %s253, %s256
      %p262 = scmp.eq.s32.totalorder %s23, 0
      %p263 = por %p261, %p262
      %p264 = scmp.ne.s32.totalorder %s253, %s256
      %p265 = scmp.eq.s32.totalorder %s28, 3
      %p266 = por %p264, %p265
      %p267 = scmp.ne.s32.totalorder %s256, %s257
      %p268 = scmp.eq.s32.totalorder %s28, 0
      %p269 = por %p267, %p268
      %p270 = scmp.ne.s32.totalorder %s256, %s257
      %p271 = scmp.eq.s32.totalorder %s29, 3
      %p272 = por %p270, %p271
      %p274 = scmp.ne.s32.totalorder %s257, %s273
      %p275 = scmp.eq.s32.totalorder %s29, 0
      %p276 = por %p274, %p275
      %s277 = ssub.s32 %s23, %s30
      %p278 = scmp.eq.s32.totalorder %s277, 0
      %s280 = sadd.s32 %s279, 1
      %s281 = scalar_select %p278, %s279, %s280
      %p284 = pneg %p278
      %p285 = scmp.eq.s32.totalorder %s23, 3
      %p286 = por %p284, %p285
      %p287 = scmp.ne.s32.totalorder %s279, %s282
      %p288 = scmp.eq.s32.totalorder %s23, 0
      %p289 = por %p287, %p288
      %p290 = scmp.ne.s32.totalorder %s279, %s282
      %p291 = scmp.eq.s32.totalorder %s28, 3
      %p292 = por %p290, %p291
      %p293 = scmp.ne.s32.totalorder %s282, %s283
      %p294 = scmp.eq.s32.totalorder %s28, 0
      %p295 = por %p293, %p294
      %p296 = scmp.ne.s32.totalorder %s282, %s283
      %p297 = scmp.eq.s32.totalorder %s29, 3
      %p298 = por %p296, %p297
      %p300 = scmp.ne.s32.totalorder %s283, %s299
      %p301 = scmp.eq.s32.totalorder %s29, 0
      %p302 = por %p300, %p301
      %p303 = scmp.le.s32.totalorder 1, %s23
      %p304 = scmp.lt.s32.totalorder %s23, 5
      %p305 = pnand %p303, %p304
      %p306 = pneg %p305
      // Predicated region
      $region9: #{vae_linear_forward.1} parent=5 // pred_check
        _
      $region10: #{vae_linear_forward.1} parent=5 // pred_check_branch
        %308 = sbr.rel (%p305) target = $region12
      $region11: #{vae_linear_forward.1} parent=5 // pred_region
        %s309 = ssub.s32 %s23, 1
        // Predicated region
        $region13: #{vae_linear_forward.1} parent=11 // pred_check
          %p310 = pneg %p96
        $region14: #{vae_linear_forward.1} parent=11 // pred_check_branch
          %312 = sbr.rel (%p310) target = $region16
        $region15: #{vae_linear_forward.1} parent=11 // pred_region
          _
        $region16: #{vae_linear_forward.1} parent=11 // pred_fallthru
          _
        // Predicated region
        $region17: #{vae_linear_forward.1} parent=11 // pred_check
          %p313 = pneg %p117
        $region18: #{vae_linear_forward.1} parent=11 // pred_check_branch
          %315 = sbr.rel (%p313) target = $region20
        $region19: #{vae_linear_forward.1} parent=11 // pred_region
          _
        $region20: #{vae_linear_forward.1} parent=11 // pred_fallthru
          _
        // Predicated region
        $region21: #{vae_linear_forward.1} parent=11 // pred_check
          %p316 = pneg %p138
        $region22: #{vae_linear_forward.1} parent=11 // pred_check_branch
          %318 = sbr.rel (%p316) target = $region24
        $region23: #{vae_linear_forward.1} parent=11 // pred_region
          %s320 = ssub.s32 1024, 1024
          %321 = vsyncadd [#allocation3], %s320
          %s322 = sshll.u32 [#allocation2], 4
          %s323 = int_to_ptr.vmem [resolvable:$true] %s322
          %328 = dma.hbm_to_vmem [thread:$0]  %s4, 1024, %s323, [#allocation3], 64, 64, 4
        $region24: #{vae_linear_forward.1} parent=11 // pred_fallthru
          _
        // Predicated region
        $region25: #{vae_linear_forward.1} parent=11 // pred_check
          %p329 = pneg %p159
        $region26: #{vae_linear_forward.1} parent=11 // pred_check_branch
          %331 = sbr.rel (%p329) target = $region28
        $region27: #{vae_linear_forward.1} parent=11 // pred_region
          _
        $region28: #{vae_linear_forward.1} parent=11 // pred_fallthru
          _
        // Predicated region
        $region29: #{vae_linear_forward.1} parent=11 // pred_check
          %p332 = pneg %p180
        $region30: #{vae_linear_forward.1} parent=11 // pred_check_branch
          %334 = sbr.rel (%p332) target = $region32
        $region31: #{vae_linear_forward.1} parent=11 // pred_region
          _
        $region32: #{vae_linear_forward.1} parent=11 // pred_fallthru
          _
        // Predicated region
        $region33: #{vae_linear_forward.1} parent=11 // pred_check
          %p335 = pneg %p201
        $region34: #{vae_linear_forward.1} parent=11 // pred_check_branch
          %337 = sbr.rel (%p335) target = $region36
        $region35: #{vae_linear_forward.1} parent=11 // pred_region
          _
        $region36: #{vae_linear_forward.1} parent=11 // pred_fallthru
          _
        // Predicated region
        $region37: #{vae_linear_forward.1} parent=11 // pred_check
          %p338 = pneg %p222
        $region38: #{vae_linear_forward.1} parent=11 // pred_check_branch
          %340 = sbr.rel (%p338) target = $region40
        $region39: #{vae_linear_forward.1} parent=11 // pred_region
          %s342 = ssub.s32 2048, 2048
          %343 = vsyncadd [#allocation6], %s342
          %s344 = sshll.u32 [#allocation5], 4
          %s345 = int_to_ptr.vmem [resolvable:$true] %s344
          %350 = dma.hbm_to_vmem [thread:$0]  %s8, 2048, %s345, [#allocation6], 128, 128, 8
        $region40: #{vae_linear_forward.1} parent=11 // pred_fallthru
          _
        // Predicated region
        $region41: #{vae_linear_forward.1} parent=11 // pred_check
          %p351 = pneg %p243
        $region42: #{vae_linear_forward.1} parent=11 // pred_check_branch
          %353 = sbr.rel (%p351) target = $region44
        $region43: #{vae_linear_forward.1} parent=11 // pred_region
          _
        $region44: #{vae_linear_forward.1} parent=11 // pred_fallthru
          _
      $region12: #{vae_linear_forward.1} parent=5 // pred_fallthru
        _
      %p354 = scmp.lt.s32.totalorder %s23, 4
      // Predicated region
      $region45: #{vae_linear_forward.1} parent=5 // pred_check
        %p355 = pneg %p354
      $region46: #{vae_linear_forward.1} parent=5 // pred_check_branch
        %357 = sbr.rel (%p355) target = $region48
      $region47: #{vae_linear_forward.1} parent=5 // pred_region
        // Predicated region
        $region49: #{vae_linear_forward.1} parent=47 // pred_check
          %p358 = pneg %p43
        $region50: #{vae_linear_forward.1} parent=47 // pred_check_branch
          %360 = sbr.rel (%p358) target = $region52
        $region51: #{vae_linear_forward.1} parent=47 // pred_region
          %s361 = smul.u32 16, %s23
          %p362 = scmp.lt.s32.totalorder %s361, 63
          %s363 = scalar_select %p362, %s361, 63
          %s364 = smul.addr %s363, 2
          %s365 = smul.addr %s364, 4
          %s366 = scalar_lea.vmem %s0, %s365
          %s367 = smul.u32 16, %s23
        $region52: #{vae_linear_forward.1} parent=47 // pred_fallthru
          _
        // Predicated region
        $region53: #{vae_linear_forward.1} parent=47 // pred_check
          %p368 = pneg %p69
        $region54: #{vae_linear_forward.1} parent=47 // pred_check_branch
          %370 = sbr.rel (%p368) target = $region56
        $region55: #{vae_linear_forward.1} parent=47 // pred_region
          %s371 = smul.u32 16, %s23
          %p372 = scmp.lt.s32.totalorder %s371, 63
          %s373 = scalar_select %p372, %s371, 63
          %s374 = smul.addr %s373, 8
          %s375 = scalar_lea.vmem %s1, %s374
          %s376 = smul.u32 16, %s23
        $region56: #{vae_linear_forward.1} parent=47 // pred_fallthru
          _
      $region48: #{vae_linear_forward.1} parent=5 // pred_fallthru
        _
      %p377 = scmp.le.s32.totalorder 1, %s23
      %p378 = scmp.lt.s32.totalorder %s23, 5
      %p379 = pnand %p377, %p378
      %p380 = pneg %p379
      // Predicated region
      $region57: #{vae_linear_forward.1} parent=5 // pred_check
        _
      $region58: #{vae_linear_forward.1} parent=5 // pred_check_branch
        %382 = sbr.rel (%p379) target = $region60
      $region59: #{vae_linear_forward.1} parent=5 // pred_region
        %s383 = ssub.s32 %s23, 1
        // Predicated region
        $region61: #{vae_linear_forward.1} parent=59 // pred_check
          %p384 = pneg %p138
        $region62: #{vae_linear_forward.1} parent=59 // pred_check_branch
          %386 = sbr.rel (%p384) target = $region64
        $region63: #{vae_linear_forward.1} parent=59 // pred_region
          %387 = dma.done [#allocation3], 1024
        $region64: #{vae_linear_forward.1} parent=59 // pred_fallthru
          _
        // Predicated region
        $region65: #{vae_linear_forward.1} parent=59 // pred_check
          %p388 = pneg %p222
        $region66: #{vae_linear_forward.1} parent=59 // pred_check_branch
          %390 = sbr.rel (%p388) target = $region68
        $region67: #{vae_linear_forward.1} parent=59 // pred_region
          %391 = dma.done [#allocation6], 2048
        $region68: #{vae_linear_forward.1} parent=59 // pred_fallthru
          _
        %s392 = smul.u32 16, %s28
        %p393 = scmp.lt.s32.totalorder %s392, 63
        %s394 = scalar_select %p393, %s392, 63
        %s395 = smul.addr %s394, 2
        %s396 = smul.addr %s395, 4
        %s397 = scalar_lea.vmem %s0, %s396
        %p398 = pneg %p49
        %p399 = pneg %p46
        %s400 = smul.u32 16, %s28
        %p401 = scmp.lt.s32.totalorder %s400, 63
        %s402 = scalar_select %p401, %s400, 63
        %s403 = smul.addr %s402, 8
        %s404 = scalar_lea.vmem %s1, %s403
        %p405 = pneg %p75
        %p406 = pneg %p72
        %p407 = pneg %p96
        %p408 = pneg %p93
        %p409 = pneg %p117
        %p410 = pneg %p114
        %p411 = pneg %p138
        %p412 = pneg %p135
        %p413 = pneg %p159
        %p414 = pneg %p156
        %p415 = pneg %p180
        %p416 = pneg %p177
        %p417 = pneg %p201
        %p418 = pneg %p198
        %p419 = pneg %p222
        %p420 = pneg %p219
        %p421 = pneg %p243
        %p422 = pneg %p240
        %p423 = pneg %p269
        %p424 = pneg %p266
        %s425 = sand.u32 %s256, 1
        %s426 = scalar_lea.sflag [#allocation4], %s425
        %s427 = sand.u32 %s256, 1
        %s428 = smul.addr %s427, 128
        %s429 = scalar_lea.vmem [#allocation7], %s428
        %p430 = pneg %p295
        %p431 = pneg %p292
        %s432 = smul.u32 16, %s28
        %p433 = scmp.lt.s32.totalorder %s432, 63
        %s434 = scalar_select %p433, %s432, 63
        %s435 = smul.addr %s434, 4
        %s436 = scalar_lea.vmem %s11, %s435
        %s437 = smul.u32 16, %s28
        %p438 = scmp.lt.s32.totalorder %s437, 63
        %s439 = scalar_select %p438, %s437, 63
        %s440 = smul.addr %s439, 2
        %s441 = smul.addr %s440, 4
        %s442 = scalar_lea.vmem %s0, %s441
        %s443 = smul.u32 16, %s28
        %s444 = smul.u32 16, %s28
        %p445 = scmp.lt.s32.totalorder %s444, 63
        %s446 = scalar_select %p445, %s444, 63
        %s447 = smul.addr %s446, 8
        %s448 = scalar_lea.vmem %s1, %s447
        %s449 = smul.u32 16, %s28
        %s450 = smul.u32 16, %s28
        %s451 = smul.u32 16, %s28
        %p452 = scmp.lt.s32.totalorder %s451, 63
        %s453 = scalar_select %p452, %s451, 63
        %s454 = smul.addr %s453, 4
        %s455 = scalar_lea.vmem %s11, %s454
        %s456 = smul.u32 16, %s28
        %v458 = vld [vmem:[%s442] sm:$0xff]
        %v459 = vld [vmem:[%s442 + $0x8] sm:$0xff]
        %v460 = vld [vmem:[%s442 + $0x10] sm:$0xff]
        %v461 = vld [vmem:[%s442 + $0x18] sm:$0xff]
        %v462 = vld [vmem:[%s442 + $0x20] sm:$0xff]
        %v463 = vld [vmem:[%s442 + $0x28] sm:$0xff]
        %v464 = vld [vmem:[%s442 + $0x30] sm:$0xff]
        %v465 = vld [vmem:[%s442 + $0x38] sm:$0xff]
        %v466 = vld [vmem:[%s442 + $0x40] sm:$0xff]
        %v467 = vld [vmem:[%s442 + $0x48] sm:$0xff]
        %v468 = vld [vmem:[%s442 + $0x50] sm:$0xff]
        %v469 = vld [vmem:[%s442 + $0x58] sm:$0xff]
        %v470 = vld [vmem:[%s442 + $0x60] sm:$0xff]
        %v471 = vld [vmem:[%s442 + $0x68] sm:$0xff]
        %v472 = vld [vmem:[%s442 + $0x70] sm:$0xff]
        %v473 = vld [vmem:[%s442 + $0x78] sm:$0xff]
        %v474 = vld [vmem:[%s448] sm:$0xff]
        %v475 = vld [vmem:[%s448 + $0x8] sm:$0xff]
        %v476 = vld [vmem:[%s448 + $0x10] sm:$0xff]
        %v477 = vld [vmem:[%s448 + $0x18] sm:$0xff]
        %v478 = vld [vmem:[%s448 + $0x20] sm:$0xff]
        %v479 = vld [vmem:[%s448 + $0x28] sm:$0xff]
        %v480 = vld [vmem:[%s448 + $0x30] sm:$0xff]
        %v481 = vld [vmem:[%s448 + $0x38] sm:$0xff]
        %v482 = vld [vmem:[%s448 + $0x40] sm:$0xff]
        %v483 = vld [vmem:[%s448 + $0x48] sm:$0xff]
        %v484 = vld [vmem:[%s448 + $0x50] sm:$0xff]
        %v485 = vld [vmem:[%s448 + $0x58] sm:$0xff]
        %v486 = vld [vmem:[%s448 + $0x60] sm:$0xff]
        %v487 = vld [vmem:[%s448 + $0x68] sm:$0xff]
        %v488 = vld [vmem:[%s448 + $0x70] sm:$0xff]
        %v489 = vld [vmem:[%s448 + $0x78] sm:$0xff]
        %v490 = vld [vmem:[%s2] sm:$0xf]
        %v491 = vld [vmem:[%s2 + $0x4] sm:$0xf]
        %v492 = vld [vmem:[%s2 + $0x8] sm:$0xf]
        %v493 = vld [vmem:[%s2 + $0xc] sm:$0xf]
        %v494 = vld [vmem:[%s2 + $0x10] sm:$0xf]
        %v495 = vld [vmem:[%s2 + $0x14] sm:$0xf]
        %v496 = vld [vmem:[%s2 + $0x18] sm:$0xf]
        %v497 = vld [vmem:[%s2 + $0x1c] sm:$0xf]
        %v498 = vld [vmem:[%s2 + $0x20] sm:$0xf]
        %v499 = vld [vmem:[%s2 + $0x24] sm:$0xf]
        %v500 = vld [vmem:[%s2 + $0x28] sm:$0xf]
        %v501 = vld [vmem:[%s2 + $0x2c] sm:$0xf]
        %v502 = vld [vmem:[%s2 + $0x30] sm:$0xf]
        %v503 = vld [vmem:[%s2 + $0x34] sm:$0xf]
        %v504 = vld [vmem:[%s2 + $0x38] sm:$0xf]
        %v505 = vld [vmem:[%s2 + $0x3c] sm:$0xf]
        %v506 = vld [vmem:[%s2 + $0x40] sm:$0xf]
        %v507 = vld [vmem:[%s2 + $0x44] sm:$0xf]
        %v508 = vld [vmem:[%s2 + $0x48] sm:$0xf]
        %v509 = vld [vmem:[%s2 + $0x4c] sm:$0xf]
        %v510 = vld [vmem:[%s2 + $0x50] sm:$0xf]
        %v511 = vld [vmem:[%s2 + $0x54] sm:$0xf]
        %v512 = vld [vmem:[%s2 + $0x58] sm:$0xf]
        %v513 = vld [vmem:[%s2 + $0x5c] sm:$0xf]
        %v514 = vld [vmem:[%s2 + $0x60] sm:$0xf]
        %v515 = vld [vmem:[%s2 + $0x64] sm:$0xf]
        %v516 = vld [vmem:[%s2 + $0x68] sm:$0xf]
        %v517 = vld [vmem:[%s2 + $0x6c] sm:$0xf]
        %v518 = vld [vmem:[%s2 + $0x70] sm:$0xf]
        %v519 = vld [vmem:[%s2 + $0x74] sm:$0xf]
        %v520 = vld [vmem:[%s2 + $0x78] sm:$0xf]
        %v521 = vld [vmem:[%s2 + $0x7c] sm:$0xf]
        %v522 = vld [vmem:[%s3] sm:$0x1]
        %v524 = vlaneseq
        %v525 = vshrl.u32 %v524, 7
        %v526 = vsub.s32 0, %v525
        %v527 = vrot.slane %v522, %v526
        %v545 = vunpack.c.l.b16 %v458
        %v546 = vunpack.c.h.b16 %v458
        %v547 = vunpack.c.l.b16 %v459
        %v548 = vunpack.c.h.b16 %v459
        %v549 = vunpack.c.l.b16 %v460
        %v550 = vunpack.c.h.b16 %v460
        %v551 = vunpack.c.l.b16 %v461
        %v552 = vunpack.c.h.b16 %v461
        %v553 = vunpack.c.l.b16 %v462
        %v554 = vunpack.c.h.b16 %v462
        %v555 = vunpack.c.l.b16 %v463
        %v556 = vunpack.c.h.b16 %v463
        %v557 = vunpack.c.l.b16 %v464
        %v558 = vunpack.c.h.b16 %v464
        %v559 = vunpack.c.l.b16 %v465
        %v560 = vunpack.c.h.b16 %v465
        %v561 = vunpack.c.l.b16 %v466
        %v562 = vunpack.c.h.b16 %v466
        %v563 = vunpack.c.l.b16 %v467
        %v564 = vunpack.c.h.b16 %v467
        %v565 = vunpack.c.l.b16 %v468
        %v566 = vunpack.c.h.b16 %v468
        %v567 = vunpack.c.l.b16 %v469
        %v568 = vunpack.c.h.b16 %v469
        %v569 = vunpack.c.l.b16 %v470
        %v570 = vunpack.c.h.b16 %v470
        %v571 = vunpack.c.l.b16 %v471
        %v572 = vunpack.c.h.b16 %v471
        %v573 = vunpack.c.l.b16 %v472
        %v574 = vunpack.c.h.b16 %v472
        %v575 = vunpack.c.l.b16 %v473
        %v576 = vunpack.c.h.b16 %v473
        %v577 = vpack.c.b16 %v547, %v545
        %v578 = vpack.c.b16 %v548, %v546
        %v579 = vpack.c.b16 %v551, %v549
        %v580 = vpack.c.b16 %v552, %v550
        %v581 = vpack.c.b16 %v555, %v553
        %v582 = vpack.c.b16 %v556, %v554
        %v583 = vpack.c.b16 %v559, %v557
        %v584 = vpack.c.b16 %v560, %v558
        %v585 = vpack.c.b16 %v563, %v561
        %v586 = vpack.c.b16 %v564, %v562
        %v587 = vpack.c.b16 %v567, %v565
        %v588 = vpack.c.b16 %v568, %v566
        %v589 = vpack.c.b16 %v571, %v569
        %v590 = vpack.c.b16 %v572, %v570
        %v591 = vpack.c.b16 %v575, %v573
        %v592 = vpack.c.b16 %v576, %v574
        %v641 = vunpack.c.l.b16 %v490
        %v642 = vunpack.c.l.b16 %v491
        %v643 = vunpack.c.l.b16 %v492
        %v644 = vunpack.c.l.b16 %v493
        %v645 = vunpack.c.l.b16 %v494
        %v646 = vunpack.c.l.b16 %v495
        %v647 = vunpack.c.l.b16 %v496
        %v648 = vunpack.c.l.b16 %v497
        %v649 = vunpack.c.l.b16 %v498
        %v650 = vunpack.c.l.b16 %v499
        %v651 = vunpack.c.l.b16 %v500
        %v652 = vunpack.c.l.b16 %v501
        %v653 = vunpack.c.l.b16 %v502
        %v654 = vunpack.c.l.b16 %v503
        %v655 = vunpack.c.l.b16 %v504
        %v656 = vunpack.c.l.b16 %v505
        %v657 = vunpack.c.l.b16 %v506
        %v658 = vunpack.c.l.b16 %v507
        %v659 = vunpack.c.l.b16 %v508
        %v660 = vunpack.c.l.b16 %v509
        %v661 = vunpack.c.l.b16 %v510
        %v662 = vunpack.c.l.b16 %v511
        %v663 = vunpack.c.l.b16 %v512
        %v664 = vunpack.c.l.b16 %v513
        %v665 = vunpack.c.l.b16 %v514
        %v666 = vunpack.c.l.b16 %v515
        %v667 = vunpack.c.l.b16 %v516
        %v668 = vunpack.c.l.b16 %v517
        %v669 = vunpack.c.l.b16 %v518
        %v670 = vunpack.c.l.b16 %v519
        %v671 = vunpack.c.l.b16 %v520
        %v672 = vunpack.c.l.b16 %v521
        %v673 = vpack.c.b16 %v642, %v641
        %v674 = vpack.c.b16 %v644, %v643
        %v675 = vpack.c.b16 %v646, %v645
        %v676 = vpack.c.b16 %v648, %v647
        %v677 = vpack.c.b16 %v650, %v649
        %v678 = vpack.c.b16 %v652, %v651
        %v679 = vpack.c.b16 %v654, %v653
        %v680 = vpack.c.b16 %v656, %v655
        %v681 = vpack.c.b16 %v658, %v657
        %v682 = vpack.c.b16 %v660, %v659
        %v683 = vpack.c.b16 %v662, %v661
        %v684 = vpack.c.b16 %v664, %v663
        %v685 = vpack.c.b16 %v666, %v665
        %v686 = vpack.c.b16 %v668, %v667
        %v687 = vpack.c.b16 %v670, %v669
        %v688 = vpack.c.b16 %v672, %v671
        %705 = vmatprep.subr.bf16.mxu0 0
        %706 = vmatpush1.bf16.msra.mxu0 %v673
        %707 = vmatprep.subr.bf16.mxu0 0
        %708 = vmatpush1.bf16.msra.mxu0 %v674
        %709 = vmatprep.subr.bf16.mxu0 0
        %710 = vmatpush1.bf16.msra.mxu0 %v675
        %711 = vmatprep.subr.bf16.mxu0 0
        %712 = vmatpush1.bf16.msra.mxu0 %v676
        %713 = vmatprep.subr.bf16.mxu0 0
        %714 = vmatpush1.bf16.msra.mxu0 %v677
        %715 = vmatprep.subr.bf16.mxu0 0
        %716 = vmatpush1.bf16.msra.mxu0 %v678
        %717 = vmatprep.subr.bf16.mxu0 0
        %718 = vmatpush1.bf16.msra.mxu0 %v679
        %719 = vmatprep.subr.bf16.mxu0 0
        %720 = vmatpush1.bf16.msra.mxu0 %v680
        %721 = vmatprep.subr.bf16.mxu0 0
        %722 = vmatpush1.bf16.msra.mxu0 %v681
        %723 = vmatprep.subr.bf16.mxu0 0
        %724 = vmatpush1.bf16.msra.mxu0 %v682
        %725 = vmatprep.subr.bf16.mxu0 0
        %726 = vmatpush1.bf16.msra.mxu0 %v683
        %727 = vmatprep.subr.bf16.mxu0 0
        %728 = vmatpush1.bf16.msra.mxu0 %v684
        %729 = vmatprep.subr.bf16.mxu0 0
        %730 = vmatpush1.bf16.msra.mxu0 %v685
        %731 = vmatprep.subr.bf16.mxu0 0
        %732 = vmatpush1.bf16.msra.mxu0 %v686
        %733 = vmatprep.subr.bf16.mxu0 0
        %734 = vmatpush1.bf16.msra.mxu0 %v687
        %735 = vmatprep.subr.bf16.mxu0 0
        %736 = vmatpush1.bf16.msra.mxu0 %v688
        %737 = vmatprep.mubr.bf16.mxu0 %v578
        %738 = vmatmul.mubr.bf16.gmra.mrb[0].mxu0 %v577
        %v739 = vpop.f32.mrb[0].mxu0
        %v740 = vadd.f32 %v527, %v739
        %v741 = vpop.f32.mrb[0].mxu0
        %v742 = vpop.f32.mrb[0].mxu0
        %v743 = vadd.f32 %v527, %v742
        %v744 = vpop.f32.mrb[0].mxu0
        %745 = vmatprep.mubr.bf16.mxu0 %v580
        %746 = vmatmul.mubr.bf16.gmra.mrb[0].mxu0 %v579
        %v747 = vpop.f32.mrb[0].mxu0
        %v748 = vadd.f32 %v527, %v747
        %v749 = vpop.f32.mrb[0].mxu0
        %v750 = vpop.f32.mrb[0].mxu0
        %v751 = vadd.f32 %v527, %v750
        %v752 = vpop.f32.mrb[0].mxu0
        %753 = vmatprep.mubr.bf16.mxu0 %v582
        %754 = vmatmul.mubr.bf16.gmra.mrb[0].mxu0 %v581
        %v755 = vpop.f32.mrb[0].mxu0
        %v756 = vadd.f32 %v527, %v755
        %v757 = vpop.f32.mrb[0].mxu0
        %v758 = vpop.f32.mrb[0].mxu0
        %v759 = vadd.f32 %v527, %v758
        %v760 = vpop.f32.mrb[0].mxu0
        %761 = vmatprep.mubr.bf16.mxu0 %v584
        %762 = vmatmul.mubr.bf16.gmra.mrb[0].mxu0 %v583
        %v763 = vpop.f32.mrb[0].mxu0
        %v764 = vadd.f32 %v527, %v763
        %v765 = vpop.f32.mrb[0].mxu0
        %v766 = vpop.f32.mrb[0].mxu0
        %v767 = vadd.f32 %v527, %v766
        %v768 = vpop.f32.mrb[0].mxu0
        %769 = vmatprep.mubr.bf16.mxu0 %v586
        %770 = vmatmul.mubr.bf16.gmra.mrb[0].mxu0 %v585
        %v771 = vpop.f32.mrb[0].mxu0
        %v772 = vadd.f32 %v527, %v771
        %v773 = vpop.f32.mrb[0].mxu0
        %v774 = vpop.f32.mrb[0].mxu0
        %v775 = vadd.f32 %v527, %v774
        %v776 = vpop.f32.mrb[0].mxu0
        %777 = vmatprep.mubr.bf16.mxu0 %v588
        %778 = vmatmul.mubr.bf16.gmra.mrb[0].mxu0 %v587
        %v779 = vpop.f32.mrb[0].mxu0
        %v780 = vadd.f32 %v527, %v779
        %v781 = vpop.f32.mrb[0].mxu0
        %v782 = vpop.f32.mrb[0].mxu0
        %v783 = vadd.f32 %v527, %v782
        %v784 = vpop.f32.mrb[0].mxu0
        %785 = vmatprep.mubr.bf16.mxu0 %v590
        %786 = vmatmul.mubr.bf16.gmra.mrb[0].mxu0 %v589
        %v787 = vpop.f32.mrb[0].mxu0
        %v788 = vadd.f32 %v527, %v787
        %v789 = vpop.f32.mrb[0].mxu0
        %v790 = vpop.f32.mrb[0].mxu0
        %v791 = vadd.f32 %v527, %v790
        %v792 = vpop.f32.mrb[0].mxu0
        %793 = vmatprep.mubr.bf16.mxu0 %v592
        %794 = vmatmul.mubr.bf16.gmra.mrb[0].mxu0 %v591
        %v795 = vpop.f32.mrb[0].mxu0
        %v796 = vadd.f32 %v527, %v795
        %v797 = vpop.f32.mrb[0].mxu0
        %v798 = vpop.f32.mrb[0].mxu0
        %v799 = vadd.f32 %v527, %v798
        %v800 = vpop.f32.mrb[0].mxu0
        %801 = vdwg.mxu0
        %v802 = vmax.f32 %v740, 0.0
        %v803 = vmax.f32 %v743, 0.0
        %v804 = vmax.f32 %v748, 0.0
        %v805 = vmax.f32 %v751, 0.0
        %v806 = vmax.f32 %v756, 0.0
        %v807 = vmax.f32 %v759, 0.0
        %v808 = vmax.f32 %v764, 0.0
        %v809 = vmax.f32 %v767, 0.0
        %v810 = vmax.f32 %v772, 0.0
        %v811 = vmax.f32 %v775, 0.0
        %v812 = vmax.f32 %v780, 0.0
        %v813 = vmax.f32 %v783, 0.0
        %v814 = vmax.f32 %v788, 0.0
        %v815 = vmax.f32 %v791, 0.0
        %v816 = vmax.f32 %v796, 0.0
        %v817 = vmax.f32 %v799, 0.0
        %v818 = vpack.c.bf16 %v803, %v802
        %v819 = vpack.c.bf16 %v805, %v804
        %v820 = vpack.c.bf16 %v807, %v806
        %v821 = vpack.c.bf16 %v809, %v808
        %v822 = vpack.c.bf16 %v811, %v810
        %v823 = vpack.c.bf16 %v813, %v812
        %v824 = vpack.c.bf16 %v815, %v814
        %v825 = vpack.c.bf16 %v817, %v816
        %v826 = vld [vmem:[#allocation2] sm:$0xf]
        %v827 = vld [vmem:[#allocation2 + $0x4] sm:$0xf]
        %v828 = vld [vmem:[#allocation2 + $0x8] sm:$0xf]
        %v829 = vld [vmem:[#allocation2 + $0xc] sm:$0xf]
        %v830 = vld [vmem:[#allocation2 + $0x10] sm:$0xf]
        %v831 = vld [vmem:[#allocation2 + $0x14] sm:$0xf]
        %v832 = vld [vmem:[#allocation2 + $0x18] sm:$0xf]
        %v833 = vld [vmem:[#allocation2 + $0x1c] sm:$0xf]
        %v834 = vld [vmem:[#allocation2 + $0x20] sm:$0xf]
        %v835 = vld [vmem:[#allocation2 + $0x24] sm:$0xf]
        %v836 = vld [vmem:[#allocation2 + $0x28] sm:$0xf]
        %v837 = vld [vmem:[#allocation2 + $0x2c] sm:$0xf]
        %v838 = vld [vmem:[#allocation2 + $0x30] sm:$0xf]
        %v839 = vld [vmem:[#allocation2 + $0x34] sm:$0xf]
        %v840 = vld [vmem:[#allocation2 + $0x38] sm:$0xf]
        %v841 = vld [vmem:[#allocation2 + $0x3c] sm:$0xf]
        %v842 = vld [vmem:[%s5] sm:$0x1]
        %v844 = vlaneseq
        %v845 = vshrl.u32 %v844, 7
        %v846 = vsub.s32 0, %v845
        %v847 = vrot.slane %v842, %v846
        %v865 = vunpack.c.l.b16 %v826
        %v866 = vunpack.c.l.b16 %v827
        %v867 = vunpack.c.l.b16 %v828
        %v868 = vunpack.c.l.b16 %v829
        %v869 = vunpack.c.l.b16 %v830
        %v870 = vunpack.c.l.b16 %v831
        %v871 = vunpack.c.l.b16 %v832
        %v872 = vunpack.c.l.b16 %v833
        %v873 = vunpack.c.l.b16 %v834
        %v874 = vunpack.c.l.b16 %v835
        %v875 = vunpack.c.l.b16 %v836
        %v876 = vunpack.c.l.b16 %v837
        %v877 = vunpack.c.l.b16 %v838
        %v878 = vunpack.c.l.b16 %v839
        %v879 = vunpack.c.l.b16 %v840
        %v880 = vunpack.c.l.b16 %v841
        %v881 = vpack.c.b16 %v866, %v865
        %v882 = vpack.c.b16 %v868, %v867
        %v883 = vpack.c.b16 %v870, %v869
        %v884 = vpack.c.b16 %v872, %v871
        %v885 = vpack.c.b16 %v874, %v873
        %v886 = vpack.c.b16 %v876, %v875
        %v887 = vpack.c.b16 %v878, %v877
        %v888 = vpack.c.b16 %v880, %v879
        %897 = vmatprep.subr.bf16.mxu0 0
        %898 = vmatpush1.bf16.msra.mxu0 %v881
        %899 = vmatprep.subr.bf16.mxu0 0
        %900 = vmatpush1.bf16.msra.mxu0 %v882
        %901 = vmatprep.subr.bf16.mxu0 0
        %902 = vmatpush1.bf16.msra.mxu0 %v883
        %903 = vmatprep.subr.bf16.mxu0 0
        %904 = vmatpush1.bf16.msra.mxu0 %v884
        %905 = vmatprep.subr.bf16.mxu0 0
        %906 = vmatpush1.bf16.msra.mxu0 %v885
        %907 = vmatprep.subr.bf16.mxu0 0
        %908 = vmatpush1.bf16.msra.mxu0 %v886
        %909 = vmatprep.subr.bf16.mxu0 0
        %910 = vmatpush1.bf16.msra.mxu0 %v887
        %911 = vmatprep.subr.bf16.mxu0 0
        %912 = vmatpush1.bf16.msra.mxu0 %v888
        %913 = vmatprep.subr.bf16.mxu0 0
        %914 = vmatpush1.bf16.msra.mxu0 0
        %915 = vmatprep.subr.bf16.mxu0 0
        %916 = vmatpush1.bf16.msra.mxu0 0
        %917 = vmatprep.subr.bf16.mxu0 0
        %918 = vmatpush1.bf16.msra.mxu0 0
        %919 = vmatprep.subr.bf16.mxu0 0
        %920 = vmatpush1.bf16.msra.mxu0 0
        %921 = vmatprep.subr.bf16.mxu0 0
        %922 = vmatpush1.bf16.msra.mxu0 0
        %923 = vmatprep.subr.bf16.mxu0 0
        %924 = vmatpush1.bf16.msra.mxu0 0
        %925 = vmatprep.subr.bf16.mxu0 0
        %926 = vmatpush1.bf16.msra.mxu0 0
        %927 = vmatprep.subr.bf16.mxu0 0
        %928 = vmatpush1.bf16.msra.mxu0 0
        %929 = vmatprep.mubr.bf16.mxu0 0
        %930 = vmatmul.mubr.bf16.gmra.mrb[0].mxu0 %v818
        %v931 = vpop.f32.mrb[0].mxu0
        %v932 = vadd.f32 %v847, %v931
        %v933 = vpop.f32.mrb[0].mxu0
        %v934 = vpop.f32.mrb[0].mxu0
        %v935 = vadd.f32 %v847, %v934
        %v936 = vpop.f32.mrb[0].mxu0
        %937 = vmatprep.mubr.bf16.mxu0 0
        %938 = vmatmul.mubr.bf16.gmra.mrb[0].mxu0 %v819
        %v939 = vpop.f32.mrb[0].mxu0
        %v940 = vadd.f32 %v847, %v939
        %v941 = vpop.f32.mrb[0].mxu0
        %v942 = vpop.f32.mrb[0].mxu0
        %v943 = vadd.f32 %v847, %v942
        %v944 = vpop.f32.mrb[0].mxu0
        %945 = vmatprep.mubr.bf16.mxu0 0
        %946 = vmatmul.mubr.bf16.gmra.mrb[0].mxu0 %v820
        %v947 = vpop.f32.mrb[0].mxu0
        %v948 = vadd.f32 %v847, %v947
        %v949 = vpop.f32.mrb[0].mxu0
        %v950 = vpop.f32.mrb[0].mxu0
        %v951 = vadd.f32 %v847, %v950
        %v952 = vpop.f32.mrb[0].mxu0
        %953 = vmatprep.mubr.bf16.mxu0 0
        %954 = vmatmul.mubr.bf16.gmra.mrb[0].mxu0 %v821
        %v955 = vpop.f32.mrb[0].mxu0
        %v956 = vadd.f32 %v847, %v955
        %v957 = vpop.f32.mrb[0].mxu0
        %v958 = vpop.f32.mrb[0].mxu0
        %v959 = vadd.f32 %v847, %v958
        %v960 = vpop.f32.mrb[0].mxu0
        %961 = vmatprep.mubr.bf16.mxu0 0
        %962 = vmatmul.mubr.bf16.gmra.mrb[0].mxu0 %v822
        %v963 = vpop.f32.mrb[0].mxu0
        %v964 = vadd.f32 %v847, %v963
        %v965 = vpop.f32.mrb[0].mxu0
        %v966 = vpop.f32.mrb[0].mxu0
        %v967 = vadd.f32 %v847, %v966
        %v968 = vpop.f32.mrb[0].mxu0
        %969 = vmatprep.mubr.bf16.mxu0 0
        %970 = vmatmul.mubr.bf16.gmra.mrb[0].mxu0 %v823
        %v971 = vpop.f32.mrb[0].mxu0
        %v972 = vadd.f32 %v847, %v971
        %v973 = vpop.f32.mrb[0].mxu0
        %v974 = vpop.f32.mrb[0].mxu0
        %v975 = vadd.f32 %v847, %v974
        %v976 = vpop.f32.mrb[0].mxu0
        %977 = vmatprep.mubr.bf16.mxu0 0
        %978 = vmatmul.mubr.bf16.gmra.mrb[0].mxu0 %v824
        %v979 = vpop.f32.mrb[0].mxu0
        %v980 = vadd.f32 %v847, %v979
        %v981 = vpop.f32.mrb[0].mxu0
        %v982 = vpop.f32.mrb[0].mxu0
        %v983 = vadd.f32 %v847, %v982
        %v984 = vpop.f32.mrb[0].mxu0
        %985 = vmatprep.mubr.bf16.mxu0 0
        %986 = vmatmul.mubr.bf16.gmra.mrb[0].mxu0 %v825
        %v987 = vpop.f32.mrb[0].mxu0
        %v988 = vadd.f32 %v847, %v987
        %v989 = vpop.f32.mrb[0].mxu0
        %v990 = vpop.f32.mrb[0].mxu0
        %v991 = vadd.f32 %v847, %v990
        %v992 = vpop.f32.mrb[0].mxu0
        %993 = vdwg.mxu0
        %v994 = vmul.f32 %v932, 0.5
        %v995 = vmul.f32 %v935, 0.5
        %v996 = vmul.f32 %v940, 0.5
        %v997 = vmul.f32 %v943, 0.5
        %v998 = vmul.f32 %v948, 0.5
        %v999 = vmul.f32 %v951, 0.5
        %v1000 = vmul.f32 %v956, 0.5
        %v1001 = vmul.f32 %v959, 0.5
        %v1002 = vmul.f32 %v964, 0.5
        %v1003 = vmul.f32 %v967, 0.5
        %v1004 = vmul.f32 %v972, 0.5
        %v1005 = vmul.f32 %v975, 0.5
        %v1006 = vmul.f32 %v980, 0.5
        %v1007 = vmul.f32 %v983, 0.5
        %v1008 = vmul.f32 %v988, 0.5
        %v1009 = vmul.f32 %v991, 0.5
        %v1010 = vmul.f32 %v994, 1.442695
        %v1011 = vpow.pop %v1010
        %v1012 = vmul.f32 %v995, 1.442695
        %v1013 = vpow.pop %v1012
        %v1014 = vmul.f32 %v996, 1.442695
        %v1015 = vpow.pop %v1014
        %v1016 = vmul.f32 %v997, 1.442695
        %v1017 = vpow.pop %v1016
        %v1018 = vmul.f32 %v998, 1.442695
        %v1019 = vpow.pop %v1018
        %v1020 = vmul.f32 %v999, 1.442695
        %v1021 = vpow.pop %v1020
        %v1022 = vmul.f32 %v1000, 1.442695
        %v1023 = vpow.pop %v1022
        %v1024 = vmul.f32 %v1001, 1.442695
        %v1025 = vpow.pop %v1024
        %v1026 = vmul.f32 %v1002, 1.442695
        %v1027 = vpow.pop %v1026
        %v1028 = vmul.f32 %v1003, 1.442695
        %v1029 = vpow.pop %v1028
        %v1030 = vmul.f32 %v1004, 1.442695
        %v1031 = vpow.pop %v1030
        %v1032 = vmul.f32 %v1005, 1.442695
        %v1033 = vpow.pop %v1032
        %v1034 = vmul.f32 %v1006, 1.442695
        %v1035 = vpow.pop %v1034
        %v1036 = vmul.f32 %v1007, 1.442695
        %v1037 = vpow.pop %v1036
        %v1038 = vmul.f32 %v1008, 1.442695
        %v1039 = vpow.pop %v1038
        %v1040 = vmul.f32 %v1009, 1.442695
        %v1041 = vpow.pop %v1040
        %1058 = vrot.lane.b32.xlu0 %v474, 32
        %v1059 = vpop.permute.xlu0 %1058
        %1060 = vrot.lane.b32.xlu0 %v475, 32
        %v1061 = vpop.permute.xlu0 %1060
        %1062 = vrot.lane.b32.xlu0 %v476, 32
        %v1063 = vpop.permute.xlu0 %1062
        %1064 = vrot.lane.b32.xlu0 %v477, 32
        %v1065 = vpop.permute.xlu0 %1064
        %1066 = vrot.lane.b32.xlu0 %v478, 32
        %v1067 = vpop.permute.xlu0 %1066
        %1068 = vrot.lane.b32.xlu0 %v479, 32
        %v1069 = vpop.permute.xlu0 %1068
        %1070 = vrot.lane.b32.xlu0 %v480, 32
        %v1071 = vpop.permute.xlu0 %1070
        %1072 = vrot.lane.b32.xlu0 %v481, 32
        %v1073 = vpop.permute.xlu0 %1072
        %1074 = vrot.lane.b32.xlu0 %v482, 32
        %v1075 = vpop.permute.xlu0 %1074
        %1076 = vrot.lane.b32.xlu0 %v483, 32
        %v1077 = vpop.permute.xlu0 %1076
        %1078 = vrot.lane.b32.xlu0 %v484, 32
        %v1079 = vpop.permute.xlu0 %1078
        %1080 = vrot.lane.b32.xlu0 %v485, 32
        %v1081 = vpop.permute.xlu0 %1080
        %1082 = vrot.lane.b32.xlu0 %v486, 32
        %v1083 = vpop.permute.xlu0 %1082
        %1084 = vrot.lane.b32.xlu0 %v487, 32
        %v1085 = vpop.permute.xlu0 %1084
        %1086 = vrot.lane.b32.xlu0 %v488, 32
        %v1087 = vpop.permute.xlu0 %1086
        %1088 = vrot.lane.b32.xlu0 %v489, 32
        %v1089 = vpop.permute.xlu0 %1088
        %v1106 = vmul.f32 %v1011, %v1059
        %v1107 = vmul.f32 %v1013, %v1061
        %v1108 = vmul.f32 %v1015, %v1063
        %v1109 = vmul.f32 %v1017, %v1065
        %v1110 = vmul.f32 %v1019, %v1067
        %v1111 = vmul.f32 %v1021, %v1069
        %v1112 = vmul.f32 %v1023, %v1071
        %v1113 = vmul.f32 %v1025, %v1073
        %v1114 = vmul.f32 %v1027, %v1075
        %v1115 = vmul.f32 %v1029, %v1077
        %v1116 = vmul.f32 %v1031, %v1079
        %v1117 = vmul.f32 %v1033, %v1081
        %v1118 = vmul.f32 %v1035, %v1083
        %v1119 = vmul.f32 %v1037, %v1085
        %v1120 = vmul.f32 %v1039, %v1087
        %v1121 = vmul.f32 %v1041, %v1089
        %1138 = vrot.lane.b32.xlu0 %v1106, 96
        %v1139 = vpop.permute.xlu0 %1138
        %1140 = vrot.lane.b32.xlu0 %v1107, 96
        %v1141 = vpop.permute.xlu0 %1140
        %1142 = vrot.lane.b32.xlu0 %v1108, 96
        %v1143 = vpop.permute.xlu0 %1142
        %1144 = vrot.lane.b32.xlu0 %v1109, 96
        %v1145 = vpop.permute.xlu0 %1144
        %1146 = vrot.lane.b32.xlu0 %v1110, 96
        %v1147 = vpop.permute.xlu0 %1146
        %1148 = vrot.lane.b32.xlu0 %v1111, 96
        %v1149 = vpop.permute.xlu0 %1148
        %1150 = vrot.lane.b32.xlu0 %v1112, 96
        %v1151 = vpop.permute.xlu0 %1150
        %1152 = vrot.lane.b32.xlu0 %v1113, 96
        %v1153 = vpop.permute.xlu0 %1152
        %1154 = vrot.lane.b32.xlu0 %v1114, 96
        %v1155 = vpop.permute.xlu0 %1154
        %1156 = vrot.lane.b32.xlu0 %v1115, 96
        %v1157 = vpop.permute.xlu0 %1156
        %1158 = vrot.lane.b32.xlu0 %v1116, 96
        %v1159 = vpop.permute.xlu0 %1158
        %1160 = vrot.lane.b32.xlu0 %v1117, 96
        %v1161 = vpop.permute.xlu0 %1160
        %1162 = vrot.lane.b32.xlu0 %v1118, 96
        %v1163 = vpop.permute.xlu0 %1162
        %1164 = vrot.lane.b32.xlu0 %v1119, 96
        %v1165 = vpop.permute.xlu0 %1164
        %1166 = vrot.lane.b32.xlu0 %v1120, 96
        %v1167 = vpop.permute.xlu0 %1166
        %1168 = vrot.lane.b32.xlu0 %v1121, 96
        %v1169 = vpop.permute.xlu0 %1168
        %v1186 = vadd.f32 %v932, %v1139
        %v1187 = vadd.f32 %v935, %v1141
        %v1188 = vadd.f32 %v940, %v1143
        %v1189 = vadd.f32 %v943, %v1145
        %v1190 = vadd.f32 %v948, %v1147
        %v1191 = vadd.f32 %v951, %v1149
        %v1192 = vadd.f32 %v956, %v1151
        %v1193 = vadd.f32 %v959, %v1153
        %v1194 = vadd.f32 %v964, %v1155
        %v1195 = vadd.f32 %v967, %v1157
        %v1196 = vadd.f32 %v972, %v1159
        %v1197 = vadd.f32 %v975, %v1161
        %v1198 = vadd.f32 %v980, %v1163
        %v1199 = vadd.f32 %v983, %v1165
        %v1200 = vadd.f32 %v988, %v1167
        %v1201 = vadd.f32 %v991, %v1169
        %v1202 = vpack.c.bf16 %v1187, %v1186
        %v1203 = vpack.c.bf16 %v1189, %v1188
        %v1204 = vpack.c.bf16 %v1191, %v1190
        %v1205 = vpack.c.bf16 %v1193, %v1192
        %v1206 = vpack.c.bf16 %v1195, %v1194
        %v1207 = vpack.c.bf16 %v1197, %v1196
        %v1208 = vpack.c.bf16 %v1199, %v1198
        %v1209 = vpack.c.bf16 %v1201, %v1200
        %v1210 = vld [vmem:[%s6] sm:$0xf]
        %v1211 = vld [vmem:[%s6 + $0x4] sm:$0xf]
        %v1212 = vld [vmem:[%s6 + $0x8] sm:$0xf]
        %v1213 = vld [vmem:[%s6 + $0xc] sm:$0xf]
        %v1214 = vld [vmem:[%s7] sm:$0x1]
        %v1216 = vlaneseq
        %v1217 = vshrl.u32 %v1216, 7
        %v1218 = vsub.s32 0, %v1217
        %v1219 = vrot.slane %v1214, %v1218
        %v1225 = vunpack.c.l.b16 %v1210
        %v1226 = vunpack.c.l.b16 %v1211
        %v1227 = vunpack.c.l.b16 %v1212
        %v1228 = vunpack.c.l.b16 %v1213
        %v1229 = vpack.c.b16 %v1226, %v1225
        %v1230 = vpack.c.b16 %v1228, %v1227
        %vm1233 = vcmask 261120
        %v1235 = vsel %vm1233, %v1202, 0
        %v1238 = vsel %vm1233, %v1203, 0
        %v1241 = vsel %vm1233, %v1204, 0
        %v1244 = vsel %vm1233, %v1205, 0
        %v1247 = vsel %vm1233, %v1206, 0
        %v1250 = vsel %vm1233, %v1207, 0
        %v1253 = vsel %vm1233, %v1208, 0
        %v1256 = vsel %vm1233, %v1209, 0
        %1258 = vmatprep.subr.bf16.mxu0 0
        %1259 = vmatpush1.bf16.msra.mxu0 %v1229
        %1260 = vmatprep.subr.bf16.mxu0 0
        %1261 = vmatpush1.bf16.msra.mxu0 %v1230
        %1262 = vmatprep.subr.bf16.mxu0 0
        %1263 = vmatpush1.bf16.msra.mxu0 0
        %1264 = vmatprep.subr.bf16.mxu0 0
        %1265 = vmatpush1.bf16.msra.mxu0 0
        %1266 = vmatprep.subr.bf16.mxu0 0
        %1267 = vmatpush1.bf16.msra.mxu0 0
        %1268 = vmatprep.subr.bf16.mxu0 0
        %1269 = vmatpush1.bf16.msra.mxu0 0
        %1270 = vmatprep.subr.bf16.mxu0 0
        %1271 = vmatpush1.bf16.msra.mxu0 0
        %1272 = vmatprep.subr.bf16.mxu0 0
        %1273 = vmatpush1.bf16.msra.mxu0 0
        %1274 = vmatprep.subr.bf16.mxu0 0
        %1275 = vmatpush1.bf16.msra.mxu0 0
        %1276 = vmatprep.subr.bf16.mxu0 0
        %1277 = vmatpush1.bf16.msra.mxu0 0
        %1278 = vmatprep.subr.bf16.mxu0 0
        %1279 = vmatpush1.bf16.msra.mxu0 0
        %1280 = vmatprep.subr.bf16.mxu0 0
        %1281 = vmatpush1.bf16.msra.mxu0 0
        %1282 = vmatprep.subr.bf16.mxu0 0
        %1283 = vmatpush1.bf16.msra.mxu0 0
        %1284 = vmatprep.subr.bf16.mxu0 0
        %1285 = vmatpush1.bf16.msra.mxu0 0
        %1286 = vmatprep.subr.bf16.mxu0 0
        %1287 = vmatpush1.bf16.msra.mxu0 0
        %1288 = vmatprep.subr.bf16.mxu0 0
        %1289 = vmatpush1.bf16.msra.mxu0 0
        %1290 = vmatprep.mubr.bf16.mxu0 0
        %1291 = vmatmul.mubr.bf16.gmra.mrb[0].mxu0 %v1235
        %v1292 = vpop.f32.mrb[0].mxu0
        %v1293 = vadd.f32 %v1219, %v1292
        %v1294 = vpop.f32.mrb[0].mxu0
        %v1295 = vpop.f32.mrb[0].mxu0
        %v1296 = vadd.f32 %v1219, %v1295
        %v1297 = vpop.f32.mrb[0].mxu0
        %1298 = vmatprep.mubr.bf16.mxu0 0
        %1299 = vmatmul.mubr.bf16.gmra.mrb[0].mxu0 %v1238
        %v1300 = vpop.f32.mrb[0].mxu0
        %v1301 = vadd.f32 %v1219, %v1300
        %v1302 = vpop.f32.mrb[0].mxu0
        %v1303 = vpop.f32.mrb[0].mxu0
        %v1304 = vadd.f32 %v1219, %v1303
        %v1305 = vpop.f32.mrb[0].mxu0
        %1306 = vmatprep.mubr.bf16.mxu0 0
        %1307 = vmatmul.mubr.bf16.gmra.mrb[0].mxu0 %v1241
        %v1308 = vpop.f32.mrb[0].mxu0
        %v1309 = vadd.f32 %v1219, %v1308
        %v1310 = vpop.f32.mrb[0].mxu0
        %v1311 = vpop.f32.mrb[0].mxu0
        %v1312 = vadd.f32 %v1219, %v1311
        %v1313 = vpop.f32.mrb[0].mxu0
        %1314 = vmatprep.mubr.bf16.mxu0 0
        %1315 = vmatmul.mubr.bf16.gmra.mrb[0].mxu0 %v1244
        %v1316 = vpop.f32.mrb[0].mxu0
        %v1317 = vadd.f32 %v1219, %v1316
        %v1318 = vpop.f32.mrb[0].mxu0
        %v1319 = vpop.f32.mrb[0].mxu0
        %v1320 = vadd.f32 %v1219, %v1319
        %v1321 = vpop.f32.mrb[0].mxu0
        %1322 = vmatprep.mubr.bf16.mxu0 0
        %1323 = vmatmul.mubr.bf16.gmra.mrb[0].mxu0 %v1247
        %v1324 = vpop.f32.mrb[0].mxu0
        %v1325 = vadd.f32 %v1219, %v1324
        %v1326 = vpop.f32.mrb[0].mxu0
        %v1327 = vpop.f32.mrb[0].mxu0
        %v1328 = vadd.f32 %v1219, %v1327
        %v1329 = vpop.f32.mrb[0].mxu0
        %1330 = vmatprep.mubr.bf16.mxu0 0
        %1331 = vmatmul.mubr.bf16.gmra.mrb[0].mxu0 %v1250
        %v1332 = vpop.f32.mrb[0].mxu0
        %v1333 = vadd.f32 %v1219, %v1332
        %v1334 = vpop.f32.mrb[0].mxu0
        %v1335 = vpop.f32.mrb[0].mxu0
        %v1336 = vadd.f32 %v1219, %v1335
        %v1337 = vpop.f32.mrb[0].mxu0
        %1338 = vmatprep.mubr.bf16.mxu0 0
        %1339 = vmatmul.mubr.bf16.gmra.mrb[0].mxu0 %v1253
        %v1340 = vpop.f32.mrb[0].mxu0
        %v1341 = vadd.f32 %v1219, %v1340
        %v1342 = vpop.f32.mrb[0].mxu0
        %v1343 = vpop.f32.mrb[0].mxu0
        %v1344 = vadd.f32 %v1219, %v1343
        %v1345 = vpop.f32.mrb[0].mxu0
        %1346 = vmatprep.mubr.bf16.mxu0 0
        %1347 = vmatmul.mubr.bf16.gmra.mrb[0].mxu0 %v1256
        %v1348 = vpop.f32.mrb[0].mxu0
        %v1349 = vadd.f32 %v1219, %v1348
        %v1350 = vpop.f32.mrb[0].mxu0
        %v1351 = vpop.f32.mrb[0].mxu0
        %v1352 = vadd.f32 %v1219, %v1351
        %v1353 = vpop.f32.mrb[0].mxu0
        %1354 = vdwg.mxu0
        %v1355 = vmax.f32 %v1293, 0.0
        %v1356 = vmax.f32 %v1296, 0.0
        %v1357 = vmax.f32 %v1301, 0.0
        %v1358 = vmax.f32 %v1304, 0.0
        %v1359 = vmax.f32 %v1309, 0.0
        %v1360 = vmax.f32 %v1312, 0.0
        %v1361 = vmax.f32 %v1317, 0.0
        %v1362 = vmax.f32 %v1320, 0.0
        %v1363 = vmax.f32 %v1325, 0.0
        %v1364 = vmax.f32 %v1328, 0.0
        %v1365 = vmax.f32 %v1333, 0.0
        %v1366 = vmax.f32 %v1336, 0.0
        %v1367 = vmax.f32 %v1341, 0.0
        %v1368 = vmax.f32 %v1344, 0.0
        %v1369 = vmax.f32 %v1349, 0.0
        %v1370 = vmax.f32 %v1352, 0.0
        %v1371 = vpack.c.bf16 %v1356, %v1355
        %v1372 = vpack.c.bf16 %v1358, %v1357
        %v1373 = vpack.c.bf16 %v1360, %v1359
        %v1374 = vpack.c.bf16 %v1362, %v1361
        %v1375 = vpack.c.bf16 %v1364, %v1363
        %v1376 = vpack.c.bf16 %v1366, %v1365
        %v1377 = vpack.c.bf16 %v1368, %v1367
        %v1378 = vpack.c.bf16 %v1370, %v1369
        %v1379 = vld [vmem:[#allocation5] sm:$0xff]
        %v1380 = vld [vmem:[#allocation5 + $0x8] sm:$0xff]
        %v1381 = vld [vmem:[#allocation5 + $0x10] sm:$0xff]
        %v1382 = vld [vmem:[#allocation5 + $0x18] sm:$0xff]
        %v1383 = vld [vmem:[#allocation5 + $0x20] sm:$0xff]
        %v1384 = vld [vmem:[#allocation5 + $0x28] sm:$0xff]
        %v1385 = vld [vmem:[#allocation5 + $0x30] sm:$0xff]
        %v1386 = vld [vmem:[#allocation5 + $0x38] sm:$0xff]
        %v1387 = vld [vmem:[#allocation5 + $0x40] sm:$0xff]
        %v1388 = vld [vmem:[#allocation5 + $0x48] sm:$0xff]
        %v1389 = vld [vmem:[#allocation5 + $0x50] sm:$0xff]
        %v1390 = vld [vmem:[#allocation5 + $0x58] sm:$0xff]
        %v1391 = vld [vmem:[#allocation5 + $0x60] sm:$0xff]
        %v1392 = vld [vmem:[#allocation5 + $0x68] sm:$0xff]
        %v1393 = vld [vmem:[#allocation5 + $0x70] sm:$0xff]
        %v1394 = vld [vmem:[#allocation5 + $0x78] sm:$0xff]
        %v1395 = vld [vmem:[%s9] sm:$0x3]
        %v1397 = vlaneseq
        %v1398 = vshrl.u32 %v1397, 7
        %v1399 = vsub.s32 0, %v1398
        %v1400 = vrot.slane %v1395, %v1399
        %v1401 = vlaneseq
        %v1402 = vshrl.u32 %v1401, 7
        %v1403 = vsub.s32 1, %v1402
        %v1404 = vrot.slane %v1395, %v1403
        %v1423 = vunpack.c.l.b16 %v1379
        %v1424 = vunpack.c.h.b16 %v1379
        %v1425 = vunpack.c.l.b16 %v1380
        %v1426 = vunpack.c.h.b16 %v1380
        %v1427 = vunpack.c.l.b16 %v1381
        %v1428 = vunpack.c.h.b16 %v1381
        %v1429 = vunpack.c.l.b16 %v1382
        %v1430 = vunpack.c.h.b16 %v1382
        %v1431 = vunpack.c.l.b16 %v1383
        %v1432 = vunpack.c.h.b16 %v1383
        %v1433 = vunpack.c.l.b16 %v1384
        %v1434 = vunpack.c.h.b16 %v1384
        %v1435 = vunpack.c.l.b16 %v1385
        %v1436 = vunpack.c.h.b16 %v1385
        %v1437 = vunpack.c.l.b16 %v1386
        %v1438 = vunpack.c.h.b16 %v1386
        %v1439 = vunpack.c.l.b16 %v1387
        %v1440 = vunpack.c.h.b16 %v1387
        %v1441 = vunpack.c.l.b16 %v1388
        %v1442 = vunpack.c.h.b16 %v1388
        %v1443 = vunpack.c.l.b16 %v1389
        %v1444 = vunpack.c.h.b16 %v1389
        %v1445 = vunpack.c.l.b16 %v1390
        %v1446 = vunpack.c.h.b16 %v1390
        %v1447 = vunpack.c.l.b16 %v1391
        %v1448 = vunpack.c.h.b16 %v1391
        %v1449 = vunpack.c.l.b16 %v1392
        %v1450 = vunpack.c.h.b16 %v1392
        %v1451 = vunpack.c.l.b16 %v1393
        %v1452 = vunpack.c.h.b16 %v1393
        %v1453 = vunpack.c.l.b16 %v1394
        %v1454 = vunpack.c.h.b16 %v1394
        %v1455 = vpack.c.b16 %v1425, %v1423
        %v1456 = vpack.c.b16 %v1426, %v1424
        %v1457 = vpack.c.b16 %v1429, %v1427
        %v1458 = vpack.c.b16 %v1430, %v1428
        %v1459 = vpack.c.b16 %v1433, %v1431
        %v1460 = vpack.c.b16 %v1434, %v1432
        %v1461 = vpack.c.b16 %v1437, %v1435
        %v1462 = vpack.c.b16 %v1438, %v1436
        %v1463 = vpack.c.b16 %v1441, %v1439
        %v1464 = vpack.c.b16 %v1442, %v1440
        %v1465 = vpack.c.b16 %v1445, %v1443
        %v1466 = vpack.c.b16 %v1446, %v1444
        %v1467 = vpack.c.b16 %v1449, %v1447
        %v1468 = vpack.c.b16 %v1450, %v1448
        %v1469 = vpack.c.b16 %v1453, %v1451
        %v1470 = vpack.c.b16 %v1454, %v1452
        %1487 = vmatprep.subr.bf16.mxu0 %v1456
        %1488 = vmatpush1.bf16.msra.mxu0 %v1455
        %1489 = vmatprep.subr.bf16.mxu0 %v1458
        %1490 = vmatpush1.bf16.msra.mxu0 %v1457
        %1491 = vmatprep.subr.bf16.mxu0 %v1460
        %1492 = vmatpush1.bf16.msra.mxu0 %v1459
        %1493 = vmatprep.subr.bf16.mxu0 %v1462
        %1494 = vmatpush1.bf16.msra.mxu0 %v1461
        %1495 = vmatprep.subr.bf16.mxu0 %v1464
        %1496 = vmatpush1.bf16.msra.mxu0 %v1463
        %1497 = vmatprep.subr.bf16.mxu0 %v1466
        %1498 = vmatpush1.bf16.msra.mxu0 %v1465
        %1499 = vmatprep.subr.bf16.mxu0 %v1468
        %1500 = vmatpush1.bf16.msra.mxu0 %v1467
        %1501 = vmatprep.subr.bf16.mxu0 %v1470
        %1502 = vmatpush1.bf16.msra.mxu0 %v1469
        %1503 = vmatprep.subr.bf16.mxu0 0
        %1504 = vmatpush1.bf16.msra.mxu0 0
        %1505 = vmatprep.subr.bf16.mxu0 0
        %1506 = vmatpush1.bf16.msra.mxu0 0
        %1507 = vmatprep.subr.bf16.mxu0 0
        %1508 = vmatpush1.bf16.msra.mxu0 0
        %1509 = vmatprep.subr.bf16.mxu0 0
        %1510 = vmatpush1.bf16.msra.mxu0 0
        %1511 = vmatprep.subr.bf16.mxu0 0
        %1512 = vmatpush1.bf16.msra.mxu0 0
        %1513 = vmatprep.subr.bf16.mxu0 0
        %1514 = vmatpush1.bf16.msra.mxu0 0
        %1515 = vmatprep.subr.bf16.mxu0 0
        %1516 = vmatpush1.bf16.msra.mxu0 0
        %1517 = vmatprep.subr.bf16.mxu0 0
        %1518 = vmatpush1.bf16.msra.mxu0 0
        %1519 = vmatprep.mubr.bf16.mxu0 0
        %1520 = vmatmul.mubr.bf16.gmra.mrb[0].mxu0 %v1371
        %v1521 = vpop.f32.mrb[0].mxu0
        %v1522 = vadd.f32 %v1400, %v1521
        %v1523 = vpop.f32.mrb[0].mxu0
        %v1524 = vadd.f32 %v1404, %v1523
        %v1525 = vpop.f32.mrb[0].mxu0
        %v1526 = vadd.f32 %v1400, %v1525
        %v1527 = vpop.f32.mrb[0].mxu0
        %v1528 = vadd.f32 %v1404, %v1527
        %1529 = vmatprep.mubr.bf16.mxu0 0
        %1530 = vmatmul.mubr.bf16.gmra.mrb[0].mxu0 %v1372
        %v1531 = vpop.f32.mrb[0].mxu0
        %v1532 = vadd.f32 %v1400, %v1531
        %v1533 = vpop.f32.mrb[0].mxu0
        %v1534 = vadd.f32 %v1404, %v1533
        %v1535 = vpop.f32.mrb[0].mxu0
        %v1536 = vadd.f32 %v1400, %v1535
        %v1537 = vpop.f32.mrb[0].mxu0
        %v1538 = vadd.f32 %v1404, %v1537
        %1539 = vmatprep.mubr.bf16.mxu0 0
        %1540 = vmatmul.mubr.bf16.gmra.mrb[0].mxu0 %v1373
        %v1541 = vpop.f32.mrb[0].mxu0
        %v1542 = vadd.f32 %v1400, %v1541
        %v1543 = vpop.f32.mrb[0].mxu0
        %v1544 = vadd.f32 %v1404, %v1543
        %v1545 = vpop.f32.mrb[0].mxu0
        %v1546 = vadd.f32 %v1400, %v1545
        %v1547 = vpop.f32.mrb[0].mxu0
        %v1548 = vadd.f32 %v1404, %v1547
        %1549 = vmatprep.mubr.bf16.mxu0 0
        %1550 = vmatmul.mubr.bf16.gmra.mrb[0].mxu0 %v1374
        %v1551 = vpop.f32.mrb[0].mxu0
        %v1552 = vadd.f32 %v1400, %v1551
        %v1553 = vpop.f32.mrb[0].mxu0
        %v1554 = vadd.f32 %v1404, %v1553
        %v1555 = vpop.f32.mrb[0].mxu0
        %v1556 = vadd.f32 %v1400, %v1555
        %v1557 = vpop.f32.mrb[0].mxu0
        %v1558 = vadd.f32 %v1404, %v1557
        %1559 = vmatprep.mubr.bf16.mxu0 0
        %1560 = vmatmul.mubr.bf16.gmra.mrb[0].mxu0 %v1375
        %v1561 = vpop.f32.mrb[0].mxu0
        %v1562 = vadd.f32 %v1400, %v1561
        %v1563 = vpop.f32.mrb[0].mxu0
        %v1564 = vadd.f32 %v1404, %v1563
        %v1565 = vpop.f32.mrb[0].mxu0
        %v1566 = vadd.f32 %v1400, %v1565
        %v1567 = vpop.f32.mrb[0].mxu0
        %v1568 = vadd.f32 %v1404, %v1567
        %1569 = vmatprep.mubr.bf16.mxu0 0
        %1570 = vmatmul.mubr.bf16.gmra.mrb[0].mxu0 %v1376
        %v1571 = vpop.f32.mrb[0].mxu0
        %v1572 = vadd.f32 %v1400, %v1571
        %v1573 = vpop.f32.mrb[0].mxu0
        %v1574 = vadd.f32 %v1404, %v1573
        %v1575 = vpop.f32.mrb[0].mxu0
        %v1576 = vadd.f32 %v1400, %v1575
        %v1577 = vpop.f32.mrb[0].mxu0
        %v1578 = vadd.f32 %v1404, %v1577
        %1579 = vmatprep.mubr.bf16.mxu0 0
        %1580 = vmatmul.mubr.bf16.gmra.mrb[0].mxu0 %v1377
        %v1581 = vpop.f32.mrb[0].mxu0
        %v1582 = vadd.f32 %v1400, %v1581
        %v1583 = vpop.f32.mrb[0].mxu0
        %v1584 = vadd.f32 %v1404, %v1583
        %v1585 = vpop.f32.mrb[0].mxu0
        %v1586 = vadd.f32 %v1400, %v1585
        %v1587 = vpop.f32.mrb[0].mxu0
        %v1588 = vadd.f32 %v1404, %v1587
        %1589 = vmatprep.mubr.bf16.mxu0 0
        %1590 = vmatmul.mubr.bf16.gmra.mrb[0].mxu0 %v1378
        %v1591 = vpop.f32.mrb[0].mxu0
        %v1592 = vadd.f32 %v1400, %v1591
        %v1593 = vpop.f32.mrb[0].mxu0
        %v1594 = vadd.f32 %v1404, %v1593
        %v1595 = vpop.f32.mrb[0].mxu0
        %v1596 = vadd.f32 %v1400, %v1595
        %v1597 = vpop.f32.mrb[0].mxu0
        %v1598 = vadd.f32 %v1404, %v1597
        %1599 = vdwg.mxu0
        %v1600 = vxor.u32 %v1522, 2147483648
        %v1601 = vxor.u32 %v1524, 2147483648
        %v1602 = vxor.u32 %v1526, 2147483648
        %v1603 = vxor.u32 %v1528, 2147483648
        %v1604 = vxor.u32 %v1532, 2147483648
        %v1605 = vxor.u32 %v1534, 2147483648
        %v1606 = vxor.u32 %v1536, 2147483648
        %v1607 = vxor.u32 %v1538, 2147483648
        %v1608 = vxor.u32 %v1542, 2147483648
        %v1609 = vxor.u32 %v1544, 2147483648
        %v1610 = vxor.u32 %v1546, 2147483648
        %v1611 = vxor.u32 %v1548, 2147483648
        %v1612 = vxor.u32 %v1552, 2147483648
        %v1613 = vxor.u32 %v1554, 2147483648
        %v1614 = vxor.u32 %v1556, 2147483648
        %v1615 = vxor.u32 %v1558, 2147483648
        %v1616 = vxor.u32 %v1562, 2147483648
        %v1617 = vxor.u32 %v1564, 2147483648
        %v1618 = vxor.u32 %v1566, 2147483648
        %v1619 = vxor.u32 %v1568, 2147483648
        %v1620 = vxor.u32 %v1572, 2147483648
        %v1621 = vxor.u32 %v1574, 2147483648
        %v1622 = vxor.u32 %v1576, 2147483648
        %v1623 = vxor.u32 %v1578, 2147483648
        %v1624 = vxor.u32 %v1582, 2147483648
        %v1625 = vxor.u32 %v1584, 2147483648
        %v1626 = vxor.u32 %v1586, 2147483648
        %v1627 = vxor.u32 %v1588, 2147483648
        %v1628 = vxor.u32 %v1592, 2147483648
        %v1629 = vxor.u32 %v1594, 2147483648
        %v1630 = vxor.u32 %v1596, 2147483648
        %v1631 = vxor.u32 %v1598, 2147483648
        %v1632 = vmul.f32 %v1600, 1.442695
        %v1633 = vpow.pop %v1632
        %v1634 = vmul.f32 %v1601, 1.442695
        %v1635 = vpow.pop %v1634
        %v1636 = vmul.f32 %v1602, 1.442695
        %v1637 = vpow.pop %v1636
        %v1638 = vmul.f32 %v1603, 1.442695
        %v1639 = vpow.pop %v1638
        %v1640 = vmul.f32 %v1604, 1.442695
        %v1641 = vpow.pop %v1640
        %v1642 = vmul.f32 %v1605, 1.442695
        %v1643 = vpow.pop %v1642
        %v1644 = vmul.f32 %v1606, 1.442695
        %v1645 = vpow.pop %v1644
        %v1646 = vmul.f32 %v1607, 1.442695
        %v1647 = vpow.pop %v1646
        %v1648 = vmul.f32 %v1608, 1.442695
        %v1649 = vpow.pop %v1648
        %v1650 = vmul.f32 %v1609, 1.442695
        %v1651 = vpow.pop %v1650
        %v1652 = vmul.f32 %v1610, 1.442695
        %v1653 = vpow.pop %v1652
        %v1654 = vmul.f32 %v1611, 1.442695
        %v1655 = vpow.pop %v1654
        %v1656 = vmul.f32 %v1612, 1.442695
        %v1657 = vpow.pop %v1656
        %v1658 = vmul.f32 %v1613, 1.442695
        %v1659 = vpow.pop %v1658
        %v1660 = vmul.f32 %v1614, 1.442695
        %v1661 = vpow.pop %v1660
        %v1662 = vmul.f32 %v1615, 1.442695
        %v1663 = vpow.pop %v1662
        %v1664 = vmul.f32 %v1616, 1.442695
        %v1665 = vpow.pop %v1664
        %v1666 = vmul.f32 %v1617, 1.442695
        %v1667 = vpow.pop %v1666
        %v1668 = vmul.f32 %v1618, 1.442695
        %v1669 = vpow.pop %v1668
        %v1670 = vmul.f32 %v1619, 1.442695
        %v1671 = vpow.pop %v1670
        %v1672 = vmul.f32 %v1620, 1.442695
        %v1673 = vpow.pop %v1672
        %v1674 = vmul.f32 %v1621, 1.442695
        %v1675 = vpow.pop %v1674
        %v1676 = vmul.f32 %v1622, 1.442695
        %v1677 = vpow.pop %v1676
        %v1678 = vmul.f32 %v1623, 1.442695
        %v1679 = vpow.pop %v1678
        %v1680 = vmul.f32 %v1624, 1.442695
        %v1681 = vpow.pop %v1680
        %v1682 = vmul.f32 %v1625, 1.442695
        %v1683 = vpow.pop %v1682
        %v1684 = vmul.f32 %v1626, 1.442695
        %v1685 = vpow.pop %v1684
        %v1686 = vmul.f32 %v1627, 1.442695
        %v1687 = vpow.pop %v1686
        %v1688 = vmul.f32 %v1628, 1.442695
        %v1689 = vpow.pop %v1688
        %v1690 = vmul.f32 %v1629, 1.442695
        %v1691 = vpow.pop %v1690
        %v1692 = vmul.f32 %v1630, 1.442695
        %v1693 = vpow.pop %v1692
        %v1694 = vmul.f32 %v1631, 1.442695
        %v1695 = vpow.pop %v1694
        %v1696 = vadd.f32 %v1633, 1.0
        %v1697 = vadd.f32 %v1635, 1.0
        %v1698 = vadd.f32 %v1637, 1.0
        %v1699 = vadd.f32 %v1639, 1.0
        %v1700 = vadd.f32 %v1641, 1.0
        %v1701 = vadd.f32 %v1643, 1.0
        %v1702 = vadd.f32 %v1645, 1.0
        %v1703 = vadd.f32 %v1647, 1.0
        %v1704 = vadd.f32 %v1649, 1.0
        %v1705 = vadd.f32 %v1651, 1.0
        %v1706 = vadd.f32 %v1653, 1.0
        %v1707 = vadd.f32 %v1655, 1.0
        %v1708 = vadd.f32 %v1657, 1.0
        %v1709 = vadd.f32 %v1659, 1.0
        %v1710 = vadd.f32 %v1661, 1.0
        %v1711 = vadd.f32 %v1663, 1.0
        %v1712 = vadd.f32 %v1665, 1.0
        %v1713 = vadd.f32 %v1667, 1.0
        %v1714 = vadd.f32 %v1669, 1.0
        %v1715 = vadd.f32 %v1671, 1.0
        %v1716 = vadd.f32 %v1673, 1.0
        %v1717 = vadd.f32 %v1675, 1.0
        %v1718 = vadd.f32 %v1677, 1.0
        %v1719 = vadd.f32 %v1679, 1.0
        %v1720 = vadd.f32 %v1681, 1.0
        %v1721 = vadd.f32 %v1683, 1.0
        %v1722 = vadd.f32 %v1685, 1.0
        %v1723 = vadd.f32 %v1687, 1.0
        %v1724 = vadd.f32 %v1689, 1.0
        %v1725 = vadd.f32 %v1691, 1.0
        %v1726 = vadd.f32 %v1693, 1.0
        %v1727 = vadd.f32 %v1695, 1.0
        %v1728 = vrcp.pop %v1696
        %v1729 = vmul.f32 1.0, %v1728
        %v1730 = vrcp.pop %v1697
        %v1731 = vmul.f32 1.0, %v1730
        %v1732 = vrcp.pop %v1698
        %v1733 = vmul.f32 1.0, %v1732
        %v1734 = vrcp.pop %v1699
        %v1735 = vmul.f32 1.0, %v1734
        %v1736 = vrcp.pop %v1700
        %v1737 = vmul.f32 1.0, %v1736
        %v1738 = vrcp.pop %v1701
        %v1739 = vmul.f32 1.0, %v1738
        %v1740 = vrcp.pop %v1702
        %v1741 = vmul.f32 1.0, %v1740
        %v1742 = vrcp.pop %v1703
        %v1743 = vmul.f32 1.0, %v1742
        %v1744 = vrcp.pop %v1704
        %v1745 = vmul.f32 1.0, %v1744
        %v1746 = vrcp.pop %v1705
        %v1747 = vmul.f32 1.0, %v1746
        %v1748 = vrcp.pop %v1706
        %v1749 = vmul.f32 1.0, %v1748
        %v1750 = vrcp.pop %v1707
        %v1751 = vmul.f32 1.0, %v1750
        %v1752 = vrcp.pop %v1708
        %v1753 = vmul.f32 1.0, %v1752
        %v1754 = vrcp.pop %v1709
        %v1755 = vmul.f32 1.0, %v1754
        %v1756 = vrcp.pop %v1710
        %v1757 = vmul.f32 1.0, %v1756
        %v1758 = vrcp.pop %v1711
        %v1759 = vmul.f32 1.0, %v1758
        %v1760 = vrcp.pop %v1712
        %v1761 = vmul.f32 1.0, %v1760
        %v1762 = vrcp.pop %v1713
        %v1763 = vmul.f32 1.0, %v1762
        %v1764 = vrcp.pop %v1714
        %v1765 = vmul.f32 1.0, %v1764
        %v1766 = vrcp.pop %v1715
        %v1767 = vmul.f32 1.0, %v1766
        %v1768 = vrcp.pop %v1716
        %v1769 = vmul.f32 1.0, %v1768
        %v1770 = vrcp.pop %v1717
        %v1771 = vmul.f32 1.0, %v1770
        %v1772 = vrcp.pop %v1718
        %v1773 = vmul.f32 1.0, %v1772
        %v1774 = vrcp.pop %v1719
        %v1775 = vmul.f32 1.0, %v1774
        %v1776 = vrcp.pop %v1720
        %v1777 = vmul.f32 1.0, %v1776
        %v1778 = vrcp.pop %v1721
        %v1779 = vmul.f32 1.0, %v1778
        %v1780 = vrcp.pop %v1722
        %v1781 = vmul.f32 1.0, %v1780
        %v1782 = vrcp.pop %v1723
        %v1783 = vmul.f32 1.0, %v1782
        %v1784 = vrcp.pop %v1724
        %v1785 = vmul.f32 1.0, %v1784
        %v1786 = vrcp.pop %v1725
        %v1787 = vmul.f32 1.0, %v1786
        %v1788 = vrcp.pop %v1726
        %v1789 = vmul.f32 1.0, %v1788
        %v1790 = vrcp.pop %v1727
        %v1791 = vmul.f32 1.0, %v1790
        %v1792 = vpack.c.bf16 %v1733, %v1729
        %v1793 = vpack.c.bf16 %v1735, %v1731
        %v1794 = vpack.c.bf16 %v1741, %v1737
        %v1795 = vpack.c.bf16 %v1743, %v1739
        %v1796 = vpack.c.bf16 %v1749, %v1745
        %v1797 = vpack.c.bf16 %v1751, %v1747
        %v1798 = vpack.c.bf16 %v1757, %v1753
        %v1799 = vpack.c.bf16 %v1759, %v1755
        %v1800 = vpack.c.bf16 %v1765, %v1761
        %v1801 = vpack.c.bf16 %v1767, %v1763
        %v1802 = vpack.c.bf16 %v1773, %v1769
        %v1803 = vpack.c.bf16 %v1775, %v1771
        %v1804 = vpack.c.bf16 %v1781, %v1777
        %v1805 = vpack.c.bf16 %v1783, %v1779
        %v1806 = vpack.c.bf16 %v1789, %v1785
        %v1807 = vpack.c.bf16 %v1791, %v1787
        %v1824 = vunpack.c.l.b16 %v1792
        %v1825 = vunpack.c.l.b16 %v1793
        %v1826 = vunpack.c.h.b16 %v1792
        %v1827 = vunpack.c.h.b16 %v1793
        %v1828 = vunpack.c.l.b16 %v1794
        %v1829 = vunpack.c.l.b16 %v1795
        %v1830 = vunpack.c.h.b16 %v1794
        %v1831 = vunpack.c.h.b16 %v1795
        %v1832 = vunpack.c.l.b16 %v1796
        %v1833 = vunpack.c.l.b16 %v1797
        %v1834 = vunpack.c.h.b16 %v1796
        %v1835 = vunpack.c.h.b16 %v1797
        %v1836 = vunpack.c.l.b16 %v1798
        %v1837 = vunpack.c.l.b16 %v1799
        %v1838 = vunpack.c.h.b16 %v1798
        %v1839 = vunpack.c.h.b16 %v1799
        %v1840 = vunpack.c.l.b16 %v1800
        %v1841 = vunpack.c.l.b16 %v1801
        %v1842 = vunpack.c.h.b16 %v1800
        %v1843 = vunpack.c.h.b16 %v1801
        %v1844 = vunpack.c.l.b16 %v1802
        %v1845 = vunpack.c.l.b16 %v1803
        %v1846 = vunpack.c.h.b16 %v1802
        %v1847 = vunpack.c.h.b16 %v1803
        %v1848 = vunpack.c.l.b16 %v1804
        %v1849 = vunpack.c.l.b16 %v1805
        %v1850 = vunpack.c.h.b16 %v1804
        %v1851 = vunpack.c.h.b16 %v1805
        %v1852 = vunpack.c.l.b16 %v1806
        %v1853 = vunpack.c.l.b16 %v1807
        %v1854 = vunpack.c.h.b16 %v1806
        %v1855 = vunpack.c.h.b16 %v1807
        %v1856 = vpack.c.b16 %v1825, %v1824
        %v1857 = vpack.c.b16 %v1827, %v1826
        %v1858 = vpack.c.b16 %v1829, %v1828
        %v1859 = vpack.c.b16 %v1831, %v1830
        %v1860 = vpack.c.b16 %v1833, %v1832
        %v1861 = vpack.c.b16 %v1835, %v1834
        %v1862 = vpack.c.b16 %v1837, %v1836
        %v1863 = vpack.c.b16 %v1839, %v1838
        %v1864 = vpack.c.b16 %v1841, %v1840
        %v1865 = vpack.c.b16 %v1843, %v1842
        %v1866 = vpack.c.b16 %v1845, %v1844
        %v1867 = vpack.c.b16 %v1847, %v1846
        %v1868 = vpack.c.b16 %v1849, %v1848
        %v1869 = vpack.c.b16 %v1851, %v1850
        %v1870 = vpack.c.b16 %v1853, %v1852
        %v1871 = vpack.c.b16 %v1855, %v1854
        %1888 = vst [vmem:[%s429] sm:$0xff] %v1856
        %1889 = vst [vmem:[%s429 + $0x8] sm:$0xff] %v1857
        %1890 = vst [vmem:[%s429 + $0x10] sm:$0xff] %v1858
        %1891 = vst [vmem:[%s429 + $0x18] sm:$0xff] %v1859
        %1892 = vst [vmem:[%s429 + $0x20] sm:$0xff] %v1860
        %1893 = vst [vmem:[%s429 + $0x28] sm:$0xff] %v1861
        %1894 = vst [vmem:[%s429 + $0x30] sm:$0xff] %v1862
        %1895 = vst [vmem:[%s429 + $0x38] sm:$0xff] %v1863
        %1896 = vst [vmem:[%s429 + $0x40] sm:$0xff] %v1864
        %1897 = vst [vmem:[%s429 + $0x48] sm:$0xff] %v1865
        %1898 = vst [vmem:[%s429 + $0x50] sm:$0xff] %v1866
        %1899 = vst [vmem:[%s429 + $0x58] sm:$0xff] %v1867
        %1900 = vst [vmem:[%s429 + $0x60] sm:$0xff] %v1868
        %1901 = vst [vmem:[%s429 + $0x68] sm:$0xff] %v1869
        %1902 = vst [vmem:[%s429 + $0x70] sm:$0xff] %v1870
        %1903 = vst [vmem:[%s429 + $0x78] sm:$0xff] %v1871
        %v1904 = vpack.c.bf16 %v935, %v932
        %v1905 = vpack.c.bf16 %v943, %v940
        %v1906 = vpack.c.bf16 %v951, %v948
        %v1907 = vpack.c.bf16 %v959, %v956
        %v1908 = vpack.c.bf16 %v967, %v964
        %v1909 = vpack.c.bf16 %v975, %v972
        %v1910 = vpack.c.bf16 %v983, %v980
        %v1911 = vpack.c.bf16 %v991, %v988
        %v1920 = vunpack.c.l.b16 %v1904
        %v1921 = vunpack.c.h.b16 %v1904
        %v1922 = vunpack.c.l.b16 %v1905
        %v1923 = vunpack.c.h.b16 %v1905
        %v1924 = vunpack.c.l.b16 %v1906
        %v1925 = vunpack.c.h.b16 %v1906
        %v1926 = vunpack.c.l.b16 %v1907
        %v1927 = vunpack.c.h.b16 %v1907
        %v1928 = vunpack.c.l.b16 %v1908
        %v1929 = vunpack.c.h.b16 %v1908
        %v1930 = vunpack.c.l.b16 %v1909
        %v1931 = vunpack.c.h.b16 %v1909
        %v1932 = vunpack.c.l.b16 %v1910
        %v1933 = vunpack.c.h.b16 %v1910
        %v1934 = vunpack.c.l.b16 %v1911
        %v1935 = vunpack.c.h.b16 %v1911
        %v1936 = vpack.c.b16 %v1920, %v1920
        %v1937 = vpack.c.b16 %v1921, %v1921
        %v1938 = vpack.c.b16 %v1922, %v1922
        %v1939 = vpack.c.b16 %v1923, %v1923
        %v1940 = vpack.c.b16 %v1924, %v1924
        %v1941 = vpack.c.b16 %v1925, %v1925
        %v1942 = vpack.c.b16 %v1926, %v1926
        %v1943 = vpack.c.b16 %v1927, %v1927
        %v1944 = vpack.c.b16 %v1928, %v1928
        %v1945 = vpack.c.b16 %v1929, %v1929
        %v1946 = vpack.c.b16 %v1930, %v1930
        %v1947 = vpack.c.b16 %v1931, %v1931
        %v1948 = vpack.c.b16 %v1932, %v1932
        %v1949 = vpack.c.b16 %v1933, %v1933
        %v1950 = vpack.c.b16 %v1934, %v1934
        %v1951 = vpack.c.b16 %v1935, %v1935
        %1968 = vst [vmem:[%s455] sm:$0xf] %v1936
        %1969 = vst [vmem:[%s455 + $0x4] sm:$0xf] %v1937
        %1970 = vst [vmem:[%s455 + $0x8] sm:$0xf] %v1938
        %1971 = vst [vmem:[%s455 + $0xc] sm:$0xf] %v1939
        %1972 = vst [vmem:[%s455 + $0x10] sm:$0xf] %v1940
        %1973 = vst [vmem:[%s455 + $0x14] sm:$0xf] %v1941
        %1974 = vst [vmem:[%s455 + $0x18] sm:$0xf] %v1942
        %1975 = vst [vmem:[%s455 + $0x1c] sm:$0xf] %v1943
        %1976 = vst [vmem:[%s455 + $0x20] sm:$0xf] %v1944
        %1977 = vst [vmem:[%s455 + $0x24] sm:$0xf] %v1945
        %1978 = vst [vmem:[%s455 + $0x28] sm:$0xf] %v1946
        %1979 = vst [vmem:[%s455 + $0x2c] sm:$0xf] %v1947
        %1980 = vst [vmem:[%s455 + $0x30] sm:$0xf] %v1948
        %1981 = vst [vmem:[%s455 + $0x34] sm:$0xf] %v1949
        %1982 = vst [vmem:[%s455 + $0x38] sm:$0xf] %v1950
        %1983 = vst [vmem:[%s455 + $0x3c] sm:$0xf] %v1951
        %s1984 = sand.u32 %s256, 1
        %s1985 = scalar_lea.sflag [#allocation4], %s1984
        %s1986 = sand.u32 %s256, 1
        %s1987 = smul.addr %s1986, 128
        %s1988 = scalar_lea.vmem [#allocation7], %s1987
        %s1989 = smul.u32 16, %s28
        %p1990 = scmp.lt.s32.totalorder %s1989, 63
        %s1991 = scalar_select %p1990, %s1989, 63
        %s1992 = smul.addr %s1991, 4
        %s1993 = scalar_lea.vmem %s11, %s1992
        // Predicated region
        $region69: #{vae_linear_forward.1} parent=59 // pred_check
          %p1994 = pneg %p266
        $region70: #{vae_linear_forward.1} parent=59 // pred_check_branch
          %1996 = sbr.rel (%p1994) target = $region72
        $region71: #{vae_linear_forward.1} parent=59 // pred_region
          %s1997 = smul.u32 16, %s28
          %s1999 = ssub.s32 2048, 2048
          %2000 = vsyncadd %s1985, %s1999
          %s2001 = smul.addr %s1997, 2
          %s2002 = smul.addr %s2001, 64
          %s2003 = scalar_lea.hbm %s10, %s2002
          %s2004 = sshll.u32 %s1988, 4
          %s2005 = int_to_ptr.vmem [resolvable:$true] %s2004
          %2010 = dma.vmem_to_hbm [thread:$0]  %s2005, 2048, %s2003, %s1985, 128, 128, 8
        $region72: #{vae_linear_forward.1} parent=59 // pred_fallthru
          _
        // Predicated region
        $region73: #{vae_linear_forward.1} parent=59 // pred_check
          %p2011 = pneg %p292
        $region74: #{vae_linear_forward.1} parent=59 // pred_check_branch
          %2013 = sbr.rel (%p2011) target = $region76
        $region75: #{vae_linear_forward.1} parent=59 // pred_region
          %s2014 = smul.u32 16, %s28
        $region76: #{vae_linear_forward.1} parent=59 // pred_fallthru
          _
      $region60: #{vae_linear_forward.1} parent=5 // pred_fallthru
        _
      %p2015 = scmp.le.s32.totalorder 2, %s23
      // Predicated region
      $region77: #{vae_linear_forward.1} parent=5 // pred_check
        %p2016 = pneg %p2015
      $region78: #{vae_linear_forward.1} parent=5 // pred_check_branch
        %2018 = sbr.rel (%p2016) target = $region80
      $region79: #{vae_linear_forward.1} parent=5 // pred_region
        %s2019 = ssub.s32 %s23, 2
        // Predicated region
        $region81: #{vae_linear_forward.1} parent=79 // pred_check
          %p2020 = pneg %p272
        $region82: #{vae_linear_forward.1} parent=79 // pred_check_branch
          %2022 = sbr.rel (%p2020) target = $region84
        $region83: #{vae_linear_forward.1} parent=79 // pred_region
          %s2023 = sand.u32 %s257, 1
          %s2024 = scalar_lea.sflag [#allocation4], %s2023
          %s2025 = sand.u32 %s257, 1
          %s2026 = smul.addr %s2025, 128
          %s2027 = scalar_lea.vmem [#allocation7], %s2026
          %2028 = dma.done %s2024, 2048
        $region84: #{vae_linear_forward.1} parent=79 // pred_fallthru
          _
        // Predicated region
        $region85: #{vae_linear_forward.1} parent=79 // pred_check
          %p2029 = pneg %p298
        $region86: #{vae_linear_forward.1} parent=79 // pred_check_branch
          %2031 = sbr.rel (%p2029) target = $region88
        $region87: #{vae_linear_forward.1} parent=79 // pred_region
          %s2032 = smul.u32 16, %s29
          %p2033 = scmp.lt.s32.totalorder %s2032, 63
          %s2034 = scalar_select %p2033, %s2032, 63
          %s2035 = smul.addr %s2034, 4
          %s2036 = scalar_lea.vmem %s11, %s2035
        $region88: #{vae_linear_forward.1} parent=79 // pred_fallthru
          _
      $region80: #{vae_linear_forward.1} parent=5 // pred_fallthru
        _
    $region6: #{vae_linear_forward.1} parent=1 // loop_footer
      %s27 = sadd.s32 1, %s23
    $region7: #{vae_linear_forward.1} parent=1 // loop_footer_branch
      %22 = sbr.rel target = $region3
    $region8: #{vae_linear_forward.1} parent=1 // loop_exit
      _
    %2037 = vsyncpa [#allocation3], 1
    %s2038 = scalar_lea.sflag [#allocation3], 1
    %2039 = vsyncpa %s2038, 1
    %2040 = vsyncpa [#allocation6], 1
    %2041 = vsyncpa [#allocation4], 1
    %s2042 = scalar_lea.sflag [#allocation4], 1
    %2043 = vsyncpa %s2042, 1

</llo_original>
